<compile_context>
chip_gen: v7x
topology: tpu7x:2x2x1
jax: 0.10.0
libtpu: 0.0.40
codegen_flags: <defaults>
</compile_context>

<pallas_src>
import functools

import jax
import jax.numpy as jnp
from jax.experimental import pallas as pl
from jax.experimental.pallas import tpu as pltpu


# ----------------------------- Pallas kernel -----------------------------

def _self_corr_kernel(x_ref, o_ref, pad_ref, *, ksize, pad, h, w):
    """One batch element of SelfCorrelationComputation.

    x_ref:   (1, h*w, c)               input features, channels-last, spatially flattened
    o_ref:   (1, ksize*ksize, h*w, c)  products for every (di, dj) offset
    pad_ref: (h+2p, w+2p, c) f32 VMEM  zero-padded normalized features (scratch)
    """
    c = x_ref.shape[-1]
    hp, wp = h + 2 * pad, w + 2 * pad

    # ReLU + L2 normalization over channels (lane reduce).  rsqrt(max(ss, eps^2)) is
    # exactly x / max(||x||, 1e-12) (sqrt is monotonic), matching F.normalize.
    x = jnp.maximum(x_ref[0].astype(jnp.float32), 0.0)            # (h*w, c)
    ss = jnp.sum(x * x, axis=-1, keepdims=True)                   # (h*w, 1)
    xn = x * jax.lax.rsqrt(jnp.maximum(ss, 1e-24))                 # (h*w, c)

    # Zero only the 4 border strips; the interior is fully overwritten right after.
    if pad > 0:
        pad_ref[0:pad, :, :] = jnp.zeros((pad, wp, c), jnp.float32)
        pad_ref[pad + h:hp, :, :] = jnp.zeros((pad, wp, c), jnp.float32)
        pad_ref[pad:pad + h, 0:pad, :] = jnp.zeros((h, pad, c), jnp.float32)
        pad_ref[pad:pad + h, pad + w:wp, :] = jnp.zeros((h, pad, c), jnp.float32)
    pad_ref[pad:pad + h, pad:pad + w, :] = xn.reshape(h, w, c)

    # ksize^2 lane-dense (c-contiguous) stores; small static unroll.
    for di in range(ksize):
        for dj in range(ksize):
            nb = pad_ref[di:di + h, dj:dj + w, :]                  # neighbour at (di-p, dj-p)
            o_ref[0, di * ksize + dj] = (xn * nb.reshape(h * w, c)).astype(o_ref.dtype)


# ----------------------------- wrapper -----------------------------

def self_correlation(x, *, ksize=5, pad=2, channels_last=False):
    """Pallas TPU forward of SelfCorrelationComputation.

    x: (B, C, H, W)
    channels_last=False -> (B, C, H, W, ksize, ksize)  exact PyTorch layout (costs one XLA
                           permute over the ksize^2-amplified output; kept for parity).
    channels_last=True  -> (B, ksize, ksize, H, W, C)  kernel-native layout, no extra HBM
                           pass -- preferred when the downstream consumer is fused/adapted.
    """
    b, c, h, w = x.shape
    elem = jnp.dtype(x.dtype).itemsize

    # Small input-side relayout only (the output is ksize^2 x larger, so this is cheap).
    x_flat = jnp.transpose(x, (0, 2, 3, 1)).reshape(b, h * w, c)

    kernel = functools.partial(_self_corr_kernel, ksize=ksize, pad=pad, h=h, w=w)

    in_block = h * w * c * elem
    out_block = ksize * ksize * h * w * c * elem
    scratch = (h + 2 * pad) * (w + 2 * pad) * c * 4
    vmem_limit = int(max(2 * (in_block + out_block) + scratch + (2 << 20), 32 << 20))
    # NOTE: at much larger H, W (e.g. H=W>=32, C=640) add an H-tile grid axis to keep the
    # per-step output block inside v7x's 64 MiB VMEM; RENet sizes are far below that.

    out = pl.pallas_call(
        kernel,
        out_shape=jax.ShapeDtypeStruct((b, ksize * ksize, h * w, c), x.dtype),
        grid=(b,),
        in_specs=[pl.BlockSpec((1, h * w, c), lambda bb: (bb, 0, 0))],
        out_specs=pl.BlockSpec((1, ksize * ksize, h * w, c), lambda bb: (bb, 0, 0, 0)),
        scratch_shapes=[pltpu.VMEM((h + 2 * pad, w + 2 * pad, c), jnp.float32)],
        compiler_params=pltpu.CompilerParams(
            dimension_semantics=("parallel",),
            vmem_limit_bytes=vmem_limit),
        cost_estimate=pl.CostEstimate(
            flops=b * h * w * c * (5 + ksize * ksize),
            transcendentals=b * h * w,
            bytes_accessed=elem * b * h * w * c * (1 + ksize * ksize)),
    )(x_flat)

    out = out.reshape(b, ksize, ksize, h, w, c)        # contiguous dim split: free
    if channels_last:
        return out                                      # (b, ki, kj, h, w, c)
    # PyTorch-parity layout: full permute of the 25x tensor -- avoid in production by
    # consuming the channels-last layout directly in the SCR conv stack.
    return jnp.transpose(out, (0, 5, 3, 4, 1, 2))       # (b, c, h, w, ki, kj)


# ----------------------------- pure-JAX reference -----------------------------

def self_correlation_reference(x, *, ksize=5, pad=2):
    """Mirrors the PyTorch forward exactly (ReLU -> normalize -> unfold -> mul -> permute)."""
    b, c, h, w = x.shape
    xr = jnp.maximum(x, 0.0)
    norm = jnp.sqrt(jnp.sum(xr * xr, axis=1, keepdims=True))
    xn = xr / jnp.maximum(norm, 1e-12)
    xpad = jnp.pad(xn, ((0, 0), (0, 0), (pad, pad), (pad, pad)))
    rows = []
    for i in range(ksize):
        cols = []
        for j in range(ksize):
            cols.append(xpad[:, :, i:i + h, j:j + w] * xn)
        rows.append(jnp.stack(cols, axis=-1))
    return jnp.stack(rows, axis=-2)                     # (b, c, h, w, ki, kj)


# ----------------------------- main -----------------------------

if __name__ == "__main__":
    ksize, pad = 5, 2
    B, C, H, W = 2, 128, 8, 8

    key = jax.random.PRNGKey(0)
    x = jax.random.normal(key, (B, C, H, W), jnp.float32)

    ref = self_correlation_reference(x, ksize=ksize, pad=pad)

    # PyTorch-layout path (exact module semantics).
    fwd = jax.jit(functools.partial(self_correlation, ksize=ksize, pad=pad))
    out = fwd(x)
    jax.block_until_ready(out)
    assert out.shape == (B, C, H, W, ksize, ksize), out.shape
    err = float(jnp.max(jnp.abs(out - ref)))
    assert err < 1e-5, f"max abs err {err}"

    # Channels-last fast path (no output permute), checked against the permuted reference.
    fwd_cl = jax.jit(functools.partial(self_correlation, ksize=ksize, pad=pad,
                                       channels_last=True))
    out_cl = fwd_cl(x)
    jax.block_until_ready(out_cl)
    ref_cl = jnp.transpose(ref, (0, 4, 5, 2, 3, 1))     # (b, ki, kj, h, w, c)
    err_cl = float(jnp.max(jnp.abs(out_cl - ref_cl)))
    assert err_cl < 1e-5, f"max abs err (channels_last) {err_cl}"

    print("KERNEL_OK")
</pallas_src>

<mosaic_0001>
module attributes {stable_mosaic.version = 11 : i64} {
  func.func @_self_corr_kernel(%arg0: i32, %arg1: memref<1x64x128xf32, #tpu.memory_space<vmem>>, %arg2: memref<1x25x64x128xf32, #tpu.memory_space<vmem>>, %arg3: memref<12x12x128xf32, #tpu.memory_space<vmem>>) attributes {dimension_semantics = [#tpu.dimension_semantics<parallel>], iteration_bounds = array<i64: 2>, scalar_prefetch = 0 : i64, scratch_operands = 1 : i64, tpu.core_type = #tpu.core_type<tc>, window_params = [{transform_indices = @transform_0, window_bounds = array<i64: 1, 64, 128>}, {transform_indices = @transform_1, window_bounds = array<i64: 1, 25, 64, 128>}]} {
    %c0 = arith.constant 0 : index
    %c0_0 = arith.constant 0 : index
    %c0_1 = arith.constant 0 : index
    %0 = vector.load %arg1[%c0, %c0_0, %c0_1] : memref<1x64x128xf32, #tpu.memory_space<vmem>>, vector<1x64x128xf32>
    %1 = vector.shape_cast %0 : vector<1x64x128xf32> to vector<64x128xf32>
    %cst = arith.constant 0.000000e+00 : f32
    %2 = vector.broadcast %cst : f32 to vector<64x128xf32>
    %3 = arith.maximumf %1, %2 : vector<64x128xf32>
    %4 = arith.mulf %3, %3 : vector<64x128xf32>
    %cst_2 = arith.constant dense<0.000000e+00> : vector<64xf32>
    %5 = vector.multi_reduction <add>, %4, %cst_2 [1] : vector<64x128xf32> to vector<64xf32>
    %6 = vector.shape_cast %5 : vector<64xf32> to vector<64x1xf32>
    %cst_3 = arith.constant 1.000000e-24 : f32
    %7 = vector.broadcast %cst_3 : f32 to vector<64x1xf32>
    %8 = arith.maximumf %6, %7 : vector<64x1xf32>
    %9 = math.rsqrt %8 : vector<64x1xf32>
    %10 = vector.broadcast %9 : vector<64x1xf32> to vector<64x128xf32>
    %11 = arith.mulf %3, %10 : vector<64x128xf32>
    %cst_4 = arith.constant 0.000000e+00 : f32
    %12 = vector.broadcast %cst_4 : f32 to vector<2x12x128xf32>
    %c0_5 = arith.constant 0 : index
    %c0_6 = arith.constant 0 : index
    %c0_7 = arith.constant 0 : index
    %13 = vector.load %arg3[%c0_5, %c0_6, %c0_7] : memref<12x12x128xf32, #tpu.memory_space<vmem>>, vector<2x12x128xf32>
    tpu.vector_store %arg3[%c0_5, %c0_6, %c0_7], %12 {strides = array<i32>} : memref<12x12x128xf32, #tpu.memory_space<vmem>>, vector<2x12x128xf32>,
    %cst_8 = arith.constant 0.000000e+00 : f32
    %14 = vector.broadcast %cst_8 : f32 to vector<2x12x128xf32>
    %c10 = arith.constant 10 : index
    %c0_9 = arith.constant 0 : index
    %c0_10 = arith.constant 0 : index
    %15 = vector.load %arg3[%c10, %c0_9, %c0_10] : memref<12x12x128xf32, #tpu.memory_space<vmem>>, vector<2x12x128xf32>
    tpu.vector_store %arg3[%c10, %c0_9, %c0_10], %14 {strides = array<i32>} : memref<12x12x128xf32, #tpu.memory_space<vmem>>, vector<2x12x128xf32>,
    %cst_11 = arith.constant 0.000000e+00 : f32
    %16 = vector.broadcast %cst_11 : f32 to vector<8x2x128xf32>
    %c2 = arith.constant 2 : index
    %c0_12 = arith.constant 0 : index
    %c0_13 = arith.constant 0 : index
    %17 = vector.load %arg3[%c2, %c0_12, %c0_13] : memref<12x12x128xf32, #tpu.memory_space<vmem>>, vector<8x2x128xf32>
    tpu.vector_store %arg3[%c2, %c0_12, %c0_13], %16 {strides = array<i32>} : memref<12x12x128xf32, #tpu.memory_space<vmem>>, vector<8x2x128xf32>,
    %cst_14 = arith.constant 0.000000e+00 : f32
    %18 = vector.broadcast %cst_14 : f32 to vector<8x2x128xf32>
    %c2_15 = arith.constant 2 : index
    %c10_16 = arith.constant 10 : index
    %c0_17 = arith.constant 0 : index
    %19 = vector.load %arg3[%c2_15, %c10_16, %c0_17] : memref<12x12x128xf32, #tpu.memory_space<vmem>>, vector<8x2x128xf32>
    tpu.vector_store %arg3[%c2_15, %c10_16, %c0_17], %18 {strides = array<i32>} : memref<12x12x128xf32, #tpu.memory_space<vmem>>, vector<8x2x128xf32>,
    %20 = vector.shape_cast %11 : vector<64x128xf32> to vector<8x8x128xf32>
    %c2_18 = arith.constant 2 : index
    %c2_19 = arith.constant 2 : index
    %c0_20 = arith.constant 0 : index
    %21 = vector.load %arg3[%c2_18, %c2_19, %c0_20] : memref<12x12x128xf32, #tpu.memory_space<vmem>>, vector<8x8x128xf32>
    tpu.vector_store %arg3[%c2_18, %c2_19, %c0_20], %20 {strides = array<i32>} : memref<12x12x128xf32, #tpu.memory_space<vmem>>, vector<8x8x128xf32>,
    %c0_21 = arith.constant 0 : index
    %c0_22 = arith.constant 0 : index
    %c0_23 = arith.constant 0 : index
    %22 = vector.load %arg3[%c0_21, %c0_22, %c0_23] : memref<12x12x128xf32, #tpu.memory_space<vmem>>, vector<8x8x128xf32>
    %23 = vector.shape_cast %22 : vector<8x8x128xf32> to vector<64x128xf32>
    %24 = arith.mulf %11, %23 : vector<64x128xf32>
    %c0_24 = arith.constant 0 : index
    %c0_25 = arith.constant 0 : index
    %c0_26 = arith.constant 0 : index
    %c0_27 = arith.constant 0 : index
    %25 = vector.load %arg2[%c0_24, %c0_25, %c0_26, %c0_27] : memref<1x25x64x128xf32, #tpu.memory_space<vmem>>, vector<1x1x64x128xf32>
    %26 = vector.shape_cast %25 : vector<1x1x64x128xf32> to vector<64x128xf32>
    %27 = vector.shape_cast %24 : vector<64x128xf32> to vector<1x1x64x128xf32>
    tpu.vector_store %arg2[%c0_24, %c0_25, %c0_26, %c0_27], %27 {strides = array<i32>} : memref<1x25x64x128xf32, #tpu.memory_space<vmem>>, vector<1x1x64x128xf32>,
    %c0_28 = arith.constant 0 : index
    %c1 = arith.constant 1 : index
    %c0_29 = arith.constant 0 : index
    %28 = vector.load %arg3[%c0_28, %c1, %c0_29] : memref<12x12x128xf32, #tpu.memory_space<vmem>>, vector<8x8x128xf32>
    %29 = vector.shape_cast %28 : vector<8x8x128xf32> to vector<64x128xf32>
    %30 = arith.mulf %11, %29 : vector<64x128xf32>
    %c0_30 = arith.constant 0 : index
    %c1_31 = arith.constant 1 : index
    %c0_32 = arith.constant 0 : index
    %c0_33 = arith.constant 0 : index
    %31 = vector.load %arg2[%c0_30, %c1_31, %c0_32, %c0_33] : memref<1x25x64x128xf32, #tpu.memory_space<vmem>>, vector<1x1x64x128xf32>
    %32 = vector.shape_cast %31 : vector<1x1x64x128xf32> to vector<64x128xf32>
    %33 = vector.shape_cast %30 : vector<64x128xf32> to vector<1x1x64x128xf32>
    tpu.vector_store %arg2[%c0_30, %c1_31, %c0_32, %c0_33], %33 {strides = array<i32>} : memref<1x25x64x128xf32, #tpu.memory_space<vmem>>, vector<1x1x64x128xf32>,
    %c0_34 = arith.constant 0 : index
    %c2_35 = arith.constant 2 : index
    %c0_36 = arith.constant 0 : index
    %34 = vector.load %arg3[%c0_34, %c2_35, %c0_36] : memref<12x12x128xf32, #tpu.memory_space<vmem>>, vector<8x8x128xf32>
    %35 = vector.shape_cast %34 : vector<8x8x128xf32> to vector<64x128xf32>
    %36 = arith.mulf %11, %35 : vector<64x128xf32>
    %c0_37 = arith.constant 0 : index
    %c2_38 = arith.constant 2 : index
    %c0_39 = arith.constant 0 : index
    %c0_40 = arith.constant 0 : index
    %37 = vector.load %arg2[%c0_37, %c2_38, %c0_39, %c0_40] : memref<1x25x64x128xf32, #tpu.memory_space<vmem>>, vector<1x1x64x128xf32>
    %38 = vector.shape_cast %37 : vector<1x1x64x128xf32> to vector<64x128xf32>
    %39 = vector.shape_cast %36 : vector<64x128xf32> to vector<1x1x64x128xf32>
    tpu.vector_store %arg2[%c0_37, %c2_38, %c0_39, %c0_40], %39 {strides = array<i32>} : memref<1x25x64x128xf32, #tpu.memory_space<vmem>>, vector<1x1x64x128xf32>,
    %c0_41 = arith.constant 0 : index
    %c3 = arith.constant 3 : index
    %c0_42 = arith.constant 0 : index
    %40 = vector.load %arg3[%c0_41, %c3, %c0_42] : memref<12x12x128xf32, #tpu.memory_space<vmem>>, vector<8x8x128xf32>
    %41 = vector.shape_cast %40 : vector<8x8x128xf32> to vector<64x128xf32>
    %42 = arith.mulf %11, %41 : vector<64x128xf32>
    %c0_43 = arith.constant 0 : index
    %c3_44 = arith.constant 3 : index
    %c0_45 = arith.constant 0 : index
    %c0_46 = arith.constant 0 : index
    %43 = vector.load %arg2[%c0_43, %c3_44, %c0_45, %c0_46] : memref<1x25x64x128xf32, #tpu.memory_space<vmem>>, vector<1x1x64x128xf32>
    %44 = vector.shape_cast %43 : vector<1x1x64x128xf32> to vector<64x128xf32>
    %45 = vector.shape_cast %42 : vector<64x128xf32> to vector<1x1x64x128xf32>
    tpu.vector_store %arg2[%c0_43, %c3_44, %c0_45, %c0_46], %45 {strides = array<i32>} : memref<1x25x64x128xf32, #tpu.memory_space<vmem>>, vector<1x1x64x128xf32>,
    %c0_47 = arith.constant 0 : index
    %c4 = arith.constant 4 : index
    %c0_48 = arith.constant 0 : index
    %46 = vector.load %arg3[%c0_47, %c4, %c0_48] : memref<12x12x128xf32, #tpu.memory_space<vmem>>, vector<8x8x128xf32>
    %47 = vector.shape_cast %46 : vector<8x8x128xf32> to vector<64x128xf32>
    %48 = arith.mulf %11, %47 : vector<64x128xf32>
    %c0_49 = arith.constant 0 : index
    %c4_50 = arith.constant 4 : index
    %c0_51 = arith.constant 0 : index
    %c0_52 = arith.constant 0 : index
    %49 = vector.load %arg2[%c0_49, %c4_50, %c0_51, %c0_52] : memref<1x25x64x128xf32, #tpu.memory_space<vmem>>, vector<1x1x64x128xf32>
    %50 = vector.shape_cast %49 : vector<1x1x64x128xf32> to vector<64x128xf32>
    %51 = vector.shape_cast %48 : vector<64x128xf32> to vector<1x1x64x128xf32>
    tpu.vector_store %arg2[%c0_49, %c4_50, %c0_51, %c0_52], %51 {strides = array<i32>} : memref<1x25x64x128xf32, #tpu.memory_space<vmem>>, vector<1x1x64x128xf32>,
    %c1_53 = arith.constant 1 : index
    %c0_54 = arith.constant 0 : index
    %c0_55 = arith.constant 0 : index
    %52 = vector.load %arg3[%c1_53, %c0_54, %c0_55] : memref<12x12x128xf32, #tpu.memory_space<vmem>>, vector<8x8x128xf32>
    %53 = vector.shape_cast %52 : vector<8x8x128xf32> to vector<64x128xf32>
    %54 = arith.mulf %11, %53 : vector<64x128xf32>
    %c0_56 = arith.constant 0 : index
    %c5 = arith.constant 5 : index
    %c0_57 = arith.constant 0 : index
    %c0_58 = arith.constant 0 : index
    %55 = vector.load %arg2[%c0_56, %c5, %c0_57, %c0_58] : memref<1x25x64x128xf32, #tpu.memory_space<vmem>>, vector<1x1x64x128xf32>
    %56 = vector.shape_cast %55 : vector<1x1x64x128xf32> to vector<64x128xf32>
    %57 = vector.shape_cast %54 : vector<64x128xf32> to vector<1x1x64x128xf32>
    tpu.vector_store %arg2[%c0_56, %c5, %c0_57, %c0_58], %57 {strides = array<i32>} : memref<1x25x64x128xf32, #tpu.memory_space<vmem>>, vector<1x1x64x128xf32>,
    %c1_59 = arith.constant 1 : index
    %c1_60 = arith.constant 1 : index
    %c0_61 = arith.constant 0 : index
    %58 = vector.load %arg3[%c1_59, %c1_60, %c0_61] : memref<12x12x128xf32, #tpu.memory_space<vmem>>, vector<8x8x128xf32>
    %59 = vector.shape_cast %58 : vector<8x8x128xf32> to vector<64x128xf32>
    %60 = arith.mulf %11, %59 : vector<64x128xf32>
    %c0_62 = arith.constant 0 : index
    %c6 = arith.constant 6 : index
    %c0_63 = arith.constant 0 : index
    %c0_64 = arith.constant 0 : index
    %61 = vector.load %arg2[%c0_62, %c6, %c0_63, %c0_64] : memref<1x25x64x128xf32, #tpu.memory_space<vmem>>, vector<1x1x64x128xf32>
    %62 = vector.shape_cast %61 : vector<1x1x64x128xf32> to vector<64x128xf32>
    %63 = vector.shape_cast %60 : vector<64x128xf32> to vector<1x1x64x128xf32>
    tpu.vector_store %arg2[%c0_62, %c6, %c0_63, %c0_64], %63 {strides = array<i32>} : memref<1x25x64x128xf32, #tpu.memory_space<vmem>>, vector<1x1x64x128xf32>,
    %c1_65 = arith.constant 1 : index
    %c2_66 = arith.constant 2 : index
    %c0_67 = arith.constant 0 : index
    %64 = vector.load %arg3[%c1_65, %c2_66, %c0_67] : memref<12x12x128xf32, #tpu.memory_space<vmem>>, vector<8x8x128xf32>
    %65 = vector.shape_cast %64 : vector<8x8x128xf32> to vector<64x128xf32>
    %66 = arith.mulf %11, %65 : vector<64x128xf32>
    %c0_68 = arith.constant 0 : index
    %c7 = arith.constant 7 : index
    %c0_69 = arith.constant 0 : index
    %c0_70 = arith.constant 0 : index
    %67 = vector.load %arg2[%c0_68, %c7, %c0_69, %c0_70] : memref<1x25x64x128xf32, #tpu.memory_space<vmem>>, vector<1x1x64x128xf32>
    %68 = vector.shape_cast %67 : vector<1x1x64x128xf32> to vector<64x128xf32>
    %69 = vector.shape_cast %66 : vector<64x128xf32> to vector<1x1x64x128xf32>
    tpu.vector_store %arg2[%c0_68, %c7, %c0_69, %c0_70], %69 {strides = array<i32>} : memref<1x25x64x128xf32, #tpu.memory_space<vmem>>, vector<1x1x64x128xf32>,
    %c1_71 = arith.constant 1 : index
    %c3_72 = arith.constant 3 : index
    %c0_73 = arith.constant 0 : index
    %70 = vector.load %arg3[%c1_71, %c3_72, %c0_73] : memref<12x12x128xf32, #tpu.memory_space<vmem>>, vector<8x8x128xf32>
    %71 = vector.shape_cast %70 : vector<8x8x128xf32> to vector<64x128xf32>
    %72 = arith.mulf %11, %71 : vector<64x128xf32>
    %c0_74 = arith.constant 0 : index
    %c8 = arith.constant 8 : index
    %c0_75 = arith.constant 0 : index
    %c0_76 = arith.constant 0 : index
    %73 = vector.load %arg2[%c0_74, %c8, %c0_75, %c0_76] : memref<1x25x64x128xf32, #tpu.memory_space<vmem>>, vector<1x1x64x128xf32>
    %74 = vector.shape_cast %73 : vector<1x1x64x128xf32> to vector<64x128xf32>
    %75 = vector.shape_cast %72 : vector<64x128xf32> to vector<1x1x64x128xf32>
    tpu.vector_store %arg2[%c0_74, %c8, %c0_75, %c0_76], %75 {strides = array<i32>} : memref<1x25x64x128xf32, #tpu.memory_space<vmem>>, vector<1x1x64x128xf32>,
    %c1_77 = arith.constant 1 : index
    %c4_78 = arith.constant 4 : index
    %c0_79 = arith.constant 0 : index
    %76 = vector.load %arg3[%c1_77, %c4_78, %c0_79] : memref<12x12x128xf32, #tpu.memory_space<vmem>>, vector<8x8x128xf32>
    %77 = vector.shape_cast %76 : vector<8x8x128xf32> to vector<64x128xf32>
    %78 = arith.mulf %11, %77 : vector<64x128xf32>
    %c0_80 = arith.constant 0 : index
    %c9 = arith.constant 9 : index
    %c0_81 = arith.constant 0 : index
    %c0_82 = arith.constant 0 : index
    %79 = vector.load %arg2[%c0_80, %c9, %c0_81, %c0_82] : memref<1x25x64x128xf32, #tpu.memory_space<vmem>>, vector<1x1x64x128xf32>
    %80 = vector.shape_cast %79 : vector<1x1x64x128xf32> to vector<64x128xf32>
    %81 = vector.shape_cast %78 : vector<64x128xf32> to vector<1x1x64x128xf32>
    tpu.vector_store %arg2[%c0_80, %c9, %c0_81, %c0_82], %81 {strides = array<i32>} : memref<1x25x64x128xf32, #tpu.memory_space<vmem>>, vector<1x1x64x128xf32>,
    %c2_83 = arith.constant 2 : index
    %c0_84 = arith.constant 0 : index
    %c0_85 = arith.constant 0 : index
    %82 = vector.load %arg3[%c2_83, %c0_84, %c0_85] : memref<12x12x128xf32, #tpu.memory_space<vmem>>, vector<8x8x128xf32>
    %83 = vector.shape_cast %82 : vector<8x8x128xf32> to vector<64x128xf32>
    %84 = arith.mulf %11, %83 : vector<64x128xf32>
    %c0_86 = arith.constant 0 : index
    %c10_87 = arith.constant 10 : index
    %c0_88 = arith.constant 0 : index
    %c0_89 = arith.constant 0 : index
    %85 = vector.load %arg2[%c0_86, %c10_87, %c0_88, %c0_89] : memref<1x25x64x128xf32, #tpu.memory_space<vmem>>, vector<1x1x64x128xf32>
    %86 = vector.shape_cast %85 : vector<1x1x64x128xf32> to vector<64x128xf32>
    %87 = vector.shape_cast %84 : vector<64x128xf32> to vector<1x1x64x128xf32>
    tpu.vector_store %arg2[%c0_86, %c10_87, %c0_88, %c0_89], %87 {strides = array<i32>} : memref<1x25x64x128xf32, #tpu.memory_space<vmem>>, vector<1x1x64x128xf32>,
    %c2_90 = arith.constant 2 : index
    %c1_91 = arith.constant 1 : index
    %c0_92 = arith.constant 0 : index
    %88 = vector.load %arg3[%c2_90, %c1_91, %c0_92] : memref<12x12x128xf32, #tpu.memory_space<vmem>>, vector<8x8x128xf32>
    %89 = vector.shape_cast %88 : vector<8x8x128xf32> to vector<64x128xf32>
    %90 = arith.mulf %11, %89 : vector<64x128xf32>
    %c0_93 = arith.constant 0 : index
    %c11 = arith.constant 11 : index
    %c0_94 = arith.constant 0 : index
    %c0_95 = arith.constant 0 : index
    %91 = vector.load %arg2[%c0_93, %c11, %c0_94, %c0_95] : memref<1x25x64x128xf32, #tpu.memory_space<vmem>>, vector<1x1x64x128xf32>
    %92 = vector.shape_cast %91 : vector<1x1x64x128xf32> to vector<64x128xf32>
    %93 = vector.shape_cast %90 : vector<64x128xf32> to vector<1x1x64x128xf32>
    tpu.vector_store %arg2[%c0_93, %c11, %c0_94, %c0_95], %93 {strides = array<i32>} : memref<1x25x64x128xf32, #tpu.memory_space<vmem>>, vector<1x1x64x128xf32>,
    %c2_96 = arith.constant 2 : index
    %c2_97 = arith.constant 2 : index
    %c0_98 = arith.constant 0 : index
    %94 = vector.load %arg3[%c2_96, %c2_97, %c0_98] : memref<12x12x128xf32, #tpu.memory_space<vmem>>, vector<8x8x128xf32>
    %95 = vector.shape_cast %94 : vector<8x8x128xf32> to vector<64x128xf32>
    %96 = arith.mulf %11, %95 : vector<64x128xf32>
    %c0_99 = arith.constant 0 : index
    %c12 = arith.constant 12 : index
    %c0_100 = arith.constant 0 : index
    %c0_101 = arith.constant 0 : index
    %97 = vector.load %arg2[%c0_99, %c12, %c0_100, %c0_101] : memref<1x25x64x128xf32, #tpu.memory_space<vmem>>, vector<1x1x64x128xf32>
    %98 = vector.shape_cast %97 : vector<1x1x64x128xf32> to vector<64x128xf32>
    %99 = vector.shape_cast %96 : vector<64x128xf32> to vector<1x1x64x128xf32>
    tpu.vector_store %arg2[%c0_99, %c12, %c0_100, %c0_101], %99 {strides = array<i32>} : memref<1x25x64x128xf32, #tpu.memory_space<vmem>>, vector<1x1x64x128xf32>,
    %c2_102 = arith.constant 2 : index
    %c3_103 = arith.constant 3 : index
    %c0_104 = arith.constant 0 : index
    %100 = vector.load %arg3[%c2_102, %c3_103, %c0_104] : memref<12x12x128xf32, #tpu.memory_space<vmem>>, vector<8x8x128xf32>
    %101 = vector.shape_cast %100 : vector<8x8x128xf32> to vector<64x128xf32>
    %102 = arith.mulf %11, %101 : vector<64x128xf32>
    %c0_105 = arith.constant 0 : index
    %c13 = arith.constant 13 : index
    %c0_106 = arith.constant 0 : index
    %c0_107 = arith.constant 0 : index
    %103 = vector.load %arg2[%c0_105, %c13, %c0_106, %c0_107] : memref<1x25x64x128xf32, #tpu.memory_space<vmem>>, vector<1x1x64x128xf32>
    %104 = vector.shape_cast %103 : vector<1x1x64x128xf32> to vector<64x128xf32>
    %105 = vector.shape_cast %102 : vector<64x128xf32> to vector<1x1x64x128xf32>
    tpu.vector_store %arg2[%c0_105, %c13, %c0_106, %c0_107], %105 {strides = array<i32>} : memref<1x25x64x128xf32, #tpu.memory_space<vmem>>, vector<1x1x64x128xf32>,
    %c2_108 = arith.constant 2 : index
    %c4_109 = arith.constant 4 : index
    %c0_110 = arith.constant 0 : index
    %106 = vector.load %arg3[%c2_108, %c4_109, %c0_110] : memref<12x12x128xf32, #tpu.memory_space<vmem>>, vector<8x8x128xf32>
    %107 = vector.shape_cast %106 : vector<8x8x128xf32> to vector<64x128xf32>
    %108 = arith.mulf %11, %107 : vector<64x128xf32>
    %c0_111 = arith.constant 0 : index
    %c14 = arith.constant 14 : index
    %c0_112 = arith.constant 0 : index
    %c0_113 = arith.constant 0 : index
    %109 = vector.load %arg2[%c0_111, %c14, %c0_112, %c0_113] : memref<1x25x64x128xf32, #tpu.memory_space<vmem>>, vector<1x1x64x128xf32>
    %110 = vector.shape_cast %109 : vector<1x1x64x128xf32> to vector<64x128xf32>
    %111 = vector.shape_cast %108 : vector<64x128xf32> to vector<1x1x64x128xf32>
    tpu.vector_store %arg2[%c0_111, %c14, %c0_112, %c0_113], %111 {strides = array<i32>} : memref<1x25x64x128xf32, #tpu.memory_space<vmem>>, vector<1x1x64x128xf32>,
    %c3_114 = arith.constant 3 : index
    %c0_115 = arith.constant 0 : index
    %c0_116 = arith.constant 0 : index
    %112 = vector.load %arg3[%c3_114, %c0_115, %c0_116] : memref<12x12x128xf32, #tpu.memory_space<vmem>>, vector<8x8x128xf32>
    %113 = vector.shape_cast %112 : vector<8x8x128xf32> to vector<64x128xf32>
    %114 = arith.mulf %11, %113 : vector<64x128xf32>
    %c0_117 = arith.constant 0 : index
    %c15 = arith.constant 15 : index
    %c0_118 = arith.constant 0 : index
    %c0_119 = arith.constant 0 : index
    %115 = vector.load %arg2[%c0_117, %c15, %c0_118, %c0_119] : memref<1x25x64x128xf32, #tpu.memory_space<vmem>>, vector<1x1x64x128xf32>
    %116 = vector.shape_cast %115 : vector<1x1x64x128xf32> to vector<64x128xf32>
    %117 = vector.shape_cast %114 : vector<64x128xf32> to vector<1x1x64x128xf32>
    tpu.vector_store %arg2[%c0_117, %c15, %c0_118, %c0_119], %117 {strides = array<i32>} : memref<1x25x64x128xf32, #tpu.memory_space<vmem>>, vector<1x1x64x128xf32>,
    %c3_120 = arith.constant 3 : index
    %c1_121 = arith.constant 1 : index
    %c0_122 = arith.constant 0 : index
    %118 = vector.load %arg3[%c3_120, %c1_121, %c0_122] : memref<12x12x128xf32, #tpu.memory_space<vmem>>, vector<8x8x128xf32>
    %119 = vector.shape_cast %118 : vector<8x8x128xf32> to vector<64x128xf32>
    %120 = arith.mulf %11, %119 : vector<64x128xf32>
    %c0_123 = arith.constant 0 : index
    %c16 = arith.constant 16 : index
    %c0_124 = arith.constant 0 : index
    %c0_125 = arith.constant 0 : index
    %121 = vector.load %arg2[%c0_123, %c16, %c0_124, %c0_125] : memref<1x25x64x128xf32, #tpu.memory_space<vmem>>, vector<1x1x64x128xf32>
    %122 = vector.shape_cast %121 : vector<1x1x64x128xf32> to vector<64x128xf32>
    %123 = vector.shape_cast %120 : vector<64x128xf32> to vector<1x1x64x128xf32>
    tpu.vector_store %arg2[%c0_123, %c16, %c0_124, %c0_125], %123 {strides = array<i32>} : memref<1x25x64x128xf32, #tpu.memory_space<vmem>>, vector<1x1x64x128xf32>,
    %c3_126 = arith.constant 3 : index
    %c2_127 = arith.constant 2 : index
    %c0_128 = arith.constant 0 : index
    %124 = vector.load %arg3[%c3_126, %c2_127, %c0_128] : memref<12x12x128xf32, #tpu.memory_space<vmem>>, vector<8x8x128xf32>
    %125 = vector.shape_cast %124 : vector<8x8x128xf32> to vector<64x128xf32>
    %126 = arith.mulf %11, %125 : vector<64x128xf32>
    %c0_129 = arith.constant 0 : index
    %c17 = arith.constant 17 : index
    %c0_130 = arith.constant 0 : index
    %c0_131 = arith.constant 0 : index
    %127 = vector.load %arg2[%c0_129, %c17, %c0_130, %c0_131] : memref<1x25x64x128xf32, #tpu.memory_space<vmem>>, vector<1x1x64x128xf32>
    %128 = vector.shape_cast %127 : vector<1x1x64x128xf32> to vector<64x128xf32>
    %129 = vector.shape_cast %126 : vector<64x128xf32> to vector<1x1x64x128xf32>
    tpu.vector_store %arg2[%c0_129, %c17, %c0_130, %c0_131], %129 {strides = array<i32>} : memref<1x25x64x128xf32, #tpu.memory_space<vmem>>, vector<1x1x64x128xf32>,
    %c3_132 = arith.constant 3 : index
    %c3_133 = arith.constant 3 : index
    %c0_134 = arith.constant 0 : index
    %130 = vector.load %arg3[%c3_132, %c3_133, %c0_134] : memref<12x12x128xf32, #tpu.memory_space<vmem>>, vector<8x8x128xf32>
    %131 = vector.shape_cast %130 : vector<8x8x128xf32> to vector<64x128xf32>
    %132 = arith.mulf %11, %131 : vector<64x128xf32>
    %c0_135 = arith.constant 0 : index
    %c18 = arith.constant 18 : index
    %c0_136 = arith.constant 0 : index
    %c0_137 = arith.constant 0 : index
    %133 = vector.load %arg2[%c0_135, %c18, %c0_136, %c0_137] : memref<1x25x64x128xf32, #tpu.memory_space<vmem>>, vector<1x1x64x128xf32>
    %134 = vector.shape_cast %133 : vector<1x1x64x128xf32> to vector<64x128xf32>
    %135 = vector.shape_cast %132 : vector<64x128xf32> to vector<1x1x64x128xf32>
    tpu.vector_store %arg2[%c0_135, %c18, %c0_136, %c0_137], %135 {strides = array<i32>} : memref<1x25x64x128xf32, #tpu.memory_space<vmem>>, vector<1x1x64x128xf32>,
    %c3_138 = arith.constant 3 : index
    %c4_139 = arith.constant 4 : index
    %c0_140 = arith.constant 0 : index
    %136 = vector.load %arg3[%c3_138, %c4_139, %c0_140] : memref<12x12x128xf32, #tpu.memory_space<vmem>>, vector<8x8x128xf32>
    %137 = vector.shape_cast %136 : vector<8x8x128xf32> to vector<64x128xf32>
    %138 = arith.mulf %11, %137 : vector<64x128xf32>
    %c0_141 = arith.constant 0 : index
    %c19 = arith.constant 19 : index
    %c0_142 = arith.constant 0 : index
    %c0_143 = arith.constant 0 : index
    %139 = vector.load %arg2[%c0_141, %c19, %c0_142, %c0_143] : memref<1x25x64x128xf32, #tpu.memory_space<vmem>>, vector<1x1x64x128xf32>
    %140 = vector.shape_cast %139 : vector<1x1x64x128xf32> to vector<64x128xf32>
    %141 = vector.shape_cast %138 : vector<64x128xf32> to vector<1x1x64x128xf32>
    tpu.vector_store %arg2[%c0_141, %c19, %c0_142, %c0_143], %141 {strides = array<i32>} : memref<1x25x64x128xf32, #tpu.memory_space<vmem>>, vector<1x1x64x128xf32>,
    %c4_144 = arith.constant 4 : index
    %c0_145 = arith.constant 0 : index
    %c0_146 = arith.constant 0 : index
    %142 = vector.load %arg3[%c4_144, %c0_145, %c0_146] : memref<12x12x128xf32, #tpu.memory_space<vmem>>, vector<8x8x128xf32>
    %143 = vector.shape_cast %142 : vector<8x8x128xf32> to vector<64x128xf32>
    %144 = arith.mulf %11, %143 : vector<64x128xf32>
    %c0_147 = arith.constant 0 : index
    %c20 = arith.constant 20 : index
    %c0_148 = arith.constant 0 : index
    %c0_149 = arith.constant 0 : index
    %145 = vector.load %arg2[%c0_147, %c20, %c0_148, %c0_149] : memref<1x25x64x128xf32, #tpu.memory_space<vmem>>, vector<1x1x64x128xf32>
    %146 = vector.shape_cast %145 : vector<1x1x64x128xf32> to vector<64x128xf32>
    %147 = vector.shape_cast %144 : vector<64x128xf32> to vector<1x1x64x128xf32>
    tpu.vector_store %arg2[%c0_147, %c20, %c0_148, %c0_149], %147 {strides = array<i32>} : memref<1x25x64x128xf32, #tpu.memory_space<vmem>>, vector<1x1x64x128xf32>,
    %c4_150 = arith.constant 4 : index
    %c1_151 = arith.constant 1 : index
    %c0_152 = arith.constant 0 : index
    %148 = vector.load %arg3[%c4_150, %c1_151, %c0_152] : memref<12x12x128xf32, #tpu.memory_space<vmem>>, vector<8x8x128xf32>
    %149 = vector.shape_cast %148 : vector<8x8x128xf32> to vector<64x128xf32>
    %150 = arith.mulf %11, %149 : vector<64x128xf32>
    %c0_153 = arith.constant 0 : index
    %c21 = arith.constant 21 : index
    %c0_154 = arith.constant 0 : index
    %c0_155 = arith.constant 0 : index
    %151 = vector.load %arg2[%c0_153, %c21, %c0_154, %c0_155] : memref<1x25x64x128xf32, #tpu.memory_space<vmem>>, vector<1x1x64x128xf32>
    %152 = vector.shape_cast %151 : vector<1x1x64x128xf32> to vector<64x128xf32>
    %153 = vector.shape_cast %150 : vector<64x128xf32> to vector<1x1x64x128xf32>
    tpu.vector_store %arg2[%c0_153, %c21, %c0_154, %c0_155], %153 {strides = array<i32>} : memref<1x25x64x128xf32, #tpu.memory_space<vmem>>, vector<1x1x64x128xf32>,
    %c4_156 = arith.constant 4 : index
    %c2_157 = arith.constant 2 : index
    %c0_158 = arith.constant 0 : index
    %154 = vector.load %arg3[%c4_156, %c2_157, %c0_158] : memref<12x12x128xf32, #tpu.memory_space<vmem>>, vector<8x8x128xf32>
    %155 = vector.shape_cast %154 : vector<8x8x128xf32> to vector<64x128xf32>
    %156 = arith.mulf %11, %155 : vector<64x128xf32>
    %c0_159 = arith.constant 0 : index
    %c22 = arith.constant 22 : index
    %c0_160 = arith.constant 0 : index
    %c0_161 = arith.constant 0 : index
    %157 = vector.load %arg2[%c0_159, %c22, %c0_160, %c0_161] : memref<1x25x64x128xf32, #tpu.memory_space<vmem>>, vector<1x1x64x128xf32>
    %158 = vector.shape_cast %157 : vector<1x1x64x128xf32> to vector<64x128xf32>
    %159 = vector.shape_cast %156 : vector<64x128xf32> to vector<1x1x64x128xf32>
    tpu.vector_store %arg2[%c0_159, %c22, %c0_160, %c0_161], %159 {strides = array<i32>} : memref<1x25x64x128xf32, #tpu.memory_space<vmem>>, vector<1x1x64x128xf32>,
    %c4_162 = arith.constant 4 : index
    %c3_163 = arith.constant 3 : index
    %c0_164 = arith.constant 0 : index
    %160 = vector.load %arg3[%c4_162, %c3_163, %c0_164] : memref<12x12x128xf32, #tpu.memory_space<vmem>>, vector<8x8x128xf32>
    %161 = vector.shape_cast %160 : vector<8x8x128xf32> to vector<64x128xf32>
    %162 = arith.mulf %11, %161 : vector<64x128xf32>
    %c0_165 = arith.constant 0 : index
    %c23 = arith.constant 23 : index
    %c0_166 = arith.constant 0 : index
    %c0_167 = arith.constant 0 : index
    %163 = vector.load %arg2[%c0_165, %c23, %c0_166, %c0_167] : memref<1x25x64x128xf32, #tpu.memory_space<vmem>>, vector<1x1x64x128xf32>
    %164 = vector.shape_cast %163 : vector<1x1x64x128xf32> to vector<64x128xf32>
    %165 = vector.shape_cast %162 : vector<64x128xf32> to vector<1x1x64x128xf32>
    tpu.vector_store %arg2[%c0_165, %c23, %c0_166, %c0_167], %165 {strides = array<i32>} : memref<1x25x64x128xf32, #tpu.memory_space<vmem>>, vector<1x1x64x128xf32>,
    %c4_168 = arith.constant 4 : index
    %c4_169 = arith.constant 4 : index
    %c0_170 = arith.constant 0 : index
    %166 = vector.load %arg3[%c4_168, %c4_169, %c0_170] : memref<12x12x128xf32, #tpu.memory_space<vmem>>, vector<8x8x128xf32>
    %167 = vector.shape_cast %166 : vector<8x8x128xf32> to vector<64x128xf32>
    %168 = arith.mulf %11, %167 : vector<64x128xf32>
    %c0_171 = arith.constant 0 : index
    %c24 = arith.constant 24 : index
    %c0_172 = arith.constant 0 : index
    %c0_173 = arith.constant 0 : index
    %169 = vector.load %arg2[%c0_171, %c24, %c0_172, %c0_173] : memref<1x25x64x128xf32, #tpu.memory_space<vmem>>, vector<1x1x64x128xf32>
    %170 = vector.shape_cast %169 : vector<1x1x64x128xf32> to vector<64x128xf32>
    %171 = vector.shape_cast %168 : vector<64x128xf32> to vector<1x1x64x128xf32>
    tpu.vector_store %arg2[%c0_171, %c24, %c0_172, %c0_173], %171 {strides = array<i32>} : memref<1x25x64x128xf32, #tpu.memory_space<vmem>>, vector<1x1x64x128xf32>,
    return
  }
  func.func @transform_0(%arg0: i32) -> (i32, i32, i32) {
    %c0_i32 = arith.constant 0 : i32
    %c0_i32_0 = arith.constant 0 : i32
    %c0_i32_1 = arith.constant 0 : i32
    return %arg0, %c0_i32, %c0_i32_0 : i32, i32, i32
  }
  func.func @transform_1(%arg0: i32) -> (i32, i32, i32, i32) {
    %c0_i32 = arith.constant 0 : i32
    %c0_i32_0 = arith.constant 0 : i32
    %c0_i32_1 = arith.constant 0 : i32
    %c0_i32_2 = arith.constant 0 : i32
    return %arg0, %c0_i32, %c0_i32_0, %c0_i32_1 : i32, i32, i32, i32
  }
}

</mosaic_0001>

<llo_original>
// kernel: self_correlation.1
$region0: #{self_correlation.1}
  #allocation0 [shape = 'u32[]', space=smem, size = 0x4, offset = 0x4, fixed_abs, tag = 'smem constant byte address 0x4 - core index']
  #allocation1 [shape = 'u32[144,128]{1,0:T(1,128)}', space=vmem, size = 0x12000, scoped, tag = 'internal scratch']
  #allocation2 [shape = 'f32[12,12,128]{2,1,0:T(8,128)}', space=vmem, size = 0x18000, scoped, tag = 'scratch operand']
  %s0 = inlined_call_operand.hbm [shape: f32[2,64,128], index: 0, kind: input, shape index: {}]
  %s1 = inlined_call_operand.vmem [shape: f32[2,25,64,128], index: 1, kind: output, shape index: {}]
  %s2 = sld [smem:[#allocation0]]
  $region41: #{self_correlation.1} parent=0
    _
  %s4 = ssub.s32 1, %s2
  %s5 = scalar_select 0, %s4, %s2
  $region1: #{self_correlation.1} parent=0
    #allocation3 [shape = 'u8[65536]{0}', space=vmem, size = 0x10000, scoped, tag = 'input window, operand 0']
    #allocation4 [shape = 's32[2]{0}', space=sflag, size = 0x8, scoped, tag = 'scoped memory for self_correlation.1']
    %6 = vsyncpa [#allocation4], 0
    %s7 = scalar_lea.sflag [#allocation4], 1
    %8 = vsyncpa %s7, 0
    loop: start=0, step=1, limit=4
    $region2: #{self_correlation.1} parent=1 // loop_pre_header
      _
    $region3: #{self_correlation.1} parent=1 // loop_header
      %s10 = sphi 0, %s14
      %p11 = scmp.ge.s32.totalorder %s10, 4
      %s20 = sphi 0, %s22
      %s23 = sphi 0, %s20
      %s24 = sphi 0, %s23
      %s40 = sphi 0, %s24
      %s46 = sphi 0, %s48
      %s49 = sphi 0, %s46
      %s50 = sphi 0, %s49
      %s66 = sphi 0, %s50
    $region4: #{self_correlation.1} parent=1 // loop_header_branch
      %13 = sbr.rel (%p11) target = $region8
    $region5: #{self_correlation.1} parent=1 // loop_body
      %s15 = ssub.s32 %s10, 1
      %s16 = ssub.s32 %s10, 2
      %s17 = sadd.s32 %s10, 1
      %s18 = ssub.s32 %s10, %s17
      %p19 = scmp.eq.s32.totalorder %s18, 0
      %s21 = sadd.s32 %s20, 1
      %s22 = scalar_select %p19, %s20, %s21
      %p25 = pneg %p19
      %p26 = scmp.eq.s32.totalorder %s10, 1
      %p27 = por %p25, %p26
      %p28 = scmp.ne.s32.totalorder %s20, %s23
      %p29 = scmp.eq.s32.totalorder %s10, 0
      %p30 = por %p28, %p29
      %p31 = scmp.ne.s32.totalorder %s20, %s23
      %p32 = scmp.eq.s32.totalorder %s15, 1
      %p33 = por %p31, %p32
      %p34 = scmp.ne.s32.totalorder %s23, %s24
      %p35 = scmp.eq.s32.totalorder %s15, 0
      %p36 = por %p34, %p35
      %p37 = scmp.ne.s32.totalorder %s23, %s24
      %p38 = scmp.eq.s32.totalorder %s16, 1
      %p39 = por %p37, %p38
      %p41 = scmp.ne.s32.totalorder %s24, %s40
      %p42 = scmp.eq.s32.totalorder %s16, 0
      %p43 = por %p41, %p42
      %s44 = ssub.s32 %s10, %s17
      %p45 = scmp.eq.s32.totalorder %s44, 0
      %s47 = sadd.s32 %s46, 1
      %s48 = scalar_select %p45, %s46, %s47
      %p51 = pneg %p45
      %p52 = scmp.eq.s32.totalorder %s10, 1
      %p53 = por %p51, %p52
      %p54 = scmp.ne.s32.totalorder %s46, %s49
      %p55 = scmp.eq.s32.totalorder %s10, 0
      %p56 = por %p54, %p55
      %p57 = scmp.ne.s32.totalorder %s46, %s49
      %p58 = scmp.eq.s32.totalorder %s15, 1
      %p59 = por %p57, %p58
      %p60 = scmp.ne.s32.totalorder %s49, %s50
      %p61 = scmp.eq.s32.totalorder %s15, 0
      %p62 = por %p60, %p61
      %p63 = scmp.ne.s32.totalorder %s49, %s50
      %p64 = scmp.eq.s32.totalorder %s16, 1
      %p65 = por %p63, %p64
      %p67 = scmp.ne.s32.totalorder %s50, %s66
      %p68 = scmp.eq.s32.totalorder %s16, 0
      %p69 = por %p67, %p68
      %p70 = scmp.le.s32.totalorder 1, %s10
      %p71 = scmp.lt.s32.totalorder %s10, 3
      %p72 = pnand %p70, %p71
      %p73 = pneg %p72
      // Predicated region
      $region9: #{self_correlation.1} parent=5 // pred_check
        _
      $region10: #{self_correlation.1} parent=5 // pred_check_branch
        %75 = sbr.rel (%p72) target = $region12
      $region11: #{self_correlation.1} parent=5 // pred_region
        %s76 = ssub.s32 %s10, 1
      $region12: #{self_correlation.1} parent=5 // pred_fallthru
        _
      %p77 = scmp.lt.s32.totalorder %s10, 2
      // Predicated region
      $region13: #{self_correlation.1} parent=5 // pred_check
        %p78 = pneg %p77
      $region14: #{self_correlation.1} parent=5 // pred_check_branch
        %80 = sbr.rel (%p78) target = $region16
      $region15: #{self_correlation.1} parent=5 // pred_region
        // Predicated region
        $region17: #{self_correlation.1} parent=15 // pred_check
          %p81 = pneg %p30
        $region18: #{self_correlation.1} parent=15 // pred_check_branch
          %83 = sbr.rel (%p81) target = $region20
        $region19: #{self_correlation.1} parent=15 // pred_region
          %s84 = sand.u32 %s20, 1
          %s85 = scalar_lea.sflag [#allocation4], %s84
          %s86 = sand.u32 %s20, 1
          %s87 = smul.addr %s86, 64
          %s88 = scalar_lea.vmem [#allocation3], %s87
          %s90 = ssub.s32 1024, 1024
          %91 = vsyncadd %s85, %s90
          %s92 = smul.addr %s10, 8
          %s93 = smul.addr %s92, 128
          %s94 = scalar_lea.hbm %s0, %s93
          %s95 = sshll.u32 %s88, 4
          %s96 = int_to_ptr.vmem [resolvable:$true] %s95
          %101 = dma.hbm_to_vmem [thread:$0]  %s94, 1024, %s96, %s85, 128, 128, 8
        $region20: #{self_correlation.1} parent=15 // pred_fallthru
          _
      $region16: #{self_correlation.1} parent=5 // pred_fallthru
        _
      %p102 = scmp.le.s32.totalorder 1, %s10
      %p103 = scmp.lt.s32.totalorder %s10, 3
      %p104 = pnand %p102, %p103
      %p105 = pneg %p104
      // Predicated region
      $region21: #{self_correlation.1} parent=5 // pred_check
        _
      $region22: #{self_correlation.1} parent=5 // pred_check_branch
        %107 = sbr.rel (%p104) target = $region24
      $region23: #{self_correlation.1} parent=5 // pred_region
        %s108 = ssub.s32 %s10, 1
        %s109 = sand.u32 %s23, 1
        %s110 = scalar_lea.sflag [#allocation4], %s109
        %s111 = sand.u32 %s23, 1
        %s112 = smul.addr %s111, 64
        %s113 = scalar_lea.vmem [#allocation3], %s112
        // Predicated region
        $region25: #{self_correlation.1} parent=23 // pred_check
          %p114 = pneg %p36
        $region26: #{self_correlation.1} parent=23 // pred_check_branch
          %116 = sbr.rel (%p114) target = $region28
        $region27: #{self_correlation.1} parent=23 // pred_region
          %117 = dma.done %s110, 1024
        $region28: #{self_correlation.1} parent=23 // pred_fallthru
          _
        %s118 = sand.u32 %s23, 1
        %s119 = scalar_lea.sflag [#allocation4], %s118
        %s120 = sand.u32 %s23, 1
        %s121 = smul.addr %s120, 64
        %s122 = scalar_lea.vmem [#allocation3], %s121
        %p123 = pneg %p36
        %p124 = pneg %p33
        %p125 = pneg %p62
        %p126 = pneg %p59
        %p127 = scmp.lt.s32.totalorder %s15, 1
        %s128 = scalar_select %p127, %s15, 1
        %s129 = smul.addr %s128, 200
        %s130 = smul.addr %s129, 8
        %s131 = scalar_lea.vmem %s1, %s130
        %p132 = scmp.lt.s32.totalorder %s15, 1
        %s133 = scalar_select %p132, %s15, 1
        %s134 = smul.addr %s133, 200
        %s135 = smul.addr %s134, 8
        %s136 = scalar_lea.vmem %s1, %s135
        %v137 = vld [vmem:[%s113] sm:$0xff]
        %v138 = vld [vmem:[%s113 + $0x8] sm:$0xff]
        %v139 = vld [vmem:[%s113 + $0x10] sm:$0xff]
        %v140 = vld [vmem:[%s113 + $0x18] sm:$0xff]
        %v141 = vld [vmem:[%s113 + $0x20] sm:$0xff]
        %v142 = vld [vmem:[%s113 + $0x28] sm:$0xff]
        %v143 = vld [vmem:[%s113 + $0x30] sm:$0xff]
        %v144 = vld [vmem:[%s113 + $0x38] sm:$0xff]
        %v145 = vmax.f32 %v137, 0.0
        %v146 = vmax.f32 %v138, 0.0
        %v147 = vmax.f32 %v139, 0.0
        %v148 = vmax.f32 %v140, 0.0
        %v149 = vmax.f32 %v141, 0.0
        %v150 = vmax.f32 %v142, 0.0
        %v151 = vmax.f32 %v143, 0.0
        %v152 = vmax.f32 %v144, 0.0
        %v153 = vmul.f32 %v145, %v145
        %v154 = vmul.f32 %v146, %v146
        %v155 = vmul.f32 %v147, %v147
        %v156 = vmul.f32 %v148, %v148
        %v157 = vmul.f32 %v149, %v149
        %v158 = vmul.f32 %v150, %v150
        %v159 = vmul.f32 %v151, %v151
        %v160 = vmul.f32 %v152, %v152
        %161 = vadd.xlane.f32.xlu0 %v153
        %v162 = vpop.xlane.xlu0 %161
        %163 = vadd.xlane.f32.xlu0 %v154
        %v164 = vpop.xlane.xlu0 %163
        %165 = vadd.xlane.f32.xlu0 %v155
        %v166 = vpop.xlane.xlu0 %165
        %167 = vadd.xlane.f32.xlu0 %v156
        %v168 = vpop.xlane.xlu0 %167
        %169 = vadd.xlane.f32.xlu0 %v157
        %v170 = vpop.xlane.xlu0 %169
        %171 = vadd.xlane.f32.xlu0 %v158
        %v172 = vpop.xlane.xlu0 %171
        %173 = vadd.xlane.f32.xlu0 %v159
        %v174 = vpop.xlane.xlu0 %173
        %175 = vadd.xlane.f32.xlu0 %v160
        %v176 = vpop.xlane.xlu0 %175
        %v177 = vmax.f32 %v162, 1e-24
        %v178 = vmax.f32 %v164, 1e-24
        %v179 = vmax.f32 %v166, 1e-24
        %v180 = vmax.f32 %v168, 1e-24
        %v181 = vmax.f32 %v170, 1e-24
        %v182 = vmax.f32 %v172, 1e-24
        %v183 = vmax.f32 %v174, 1e-24
        %v184 = vmax.f32 %v176, 1e-24
        %v185 = vrsqrt.pop %v177
        %v186 = vrsqrt.pop %v178
        %v187 = vrsqrt.pop %v179
        %v188 = vrsqrt.pop %v180
        %v189 = vrsqrt.pop %v181
        %v190 = vrsqrt.pop %v182
        %v191 = vrsqrt.pop %v183
        %v192 = vrsqrt.pop %v184
        %v193 = vmul.f32 %v145, %v185
        %v194 = vmul.f32 %v146, %v186
        %v195 = vmul.f32 %v147, %v187
        %v196 = vmul.f32 %v148, %v188
        %v197 = vmul.f32 %v149, %v189
        %v198 = vmul.f32 %v150, %v190
        %v199 = vmul.f32 %v151, %v191
        %v200 = vmul.f32 %v152, %v192
        %201 = vst [vmem:[#allocation2] sm:$0xff] 0.0
        %202 = vst [vmem:[#allocation2 + $0x8] sm:$0xf] 0.0
        %203 = vst [vmem:[#allocation2 + $0x10] sm:$0xff] 0.0
        %204 = vst [vmem:[#allocation2 + $0x18] sm:$0xf] 0.0
        %s205 = scalar_lea.vmem [#allocation2], 160
        %206 = vst [vmem:[%s205] sm:$0xff] 0.0
        %207 = vst [vmem:[%s205 + $0x8] sm:$0xf] 0.0
        %208 = vst [vmem:[%s205 + $0x10] sm:$0xff] 0.0
        %209 = vst [vmem:[%s205 + $0x18] sm:$0xf] 0.0
        %s210 = scalar_lea.vmem [#allocation2], 32
        %211 = vst [vmem:[%s210] sm:$0x3] 0.0
        %212 = vst [vmem:[%s210 + $0x10] sm:$0x3] 0.0
        %213 = vst [vmem:[%s210 + $0x20] sm:$0x3] 0.0
        %214 = vst [vmem:[%s210 + $0x30] sm:$0x3] 0.0
        %215 = vst [vmem:[%s210 + $0x40] sm:$0x3] 0.0
        %216 = vst [vmem:[%s210 + $0x50] sm:$0x3] 0.0
        %217 = vst [vmem:[%s210 + $0x60] sm:$0x3] 0.0
        %218 = vst [vmem:[%s210 + $0x70] sm:$0x3] 0.0
        %219 = vst [vmem:[%s210 + $0xa] sm:$0x3] 0.0
        %220 = vst [vmem:[%s210 + $0x1a] sm:$0x3] 0.0
        %221 = vst [vmem:[%s210 + $0x2a] sm:$0x3] 0.0
        %222 = vst [vmem:[%s210 + $0x3a] sm:$0x3] 0.0
        %223 = vst [vmem:[%s210 + $0x4a] sm:$0x3] 0.0
        %224 = vst [vmem:[%s210 + $0x5a] sm:$0x3] 0.0
        %225 = vst [vmem:[%s210 + $0x6a] sm:$0x3] 0.0
        %226 = vst [vmem:[%s210 + $0x7a] sm:$0x3] 0.0
        %227 = vst [vmem:[%s210 + $0x2] sm:$0xff] %v193
        %228 = vst [vmem:[%s210 + $0x12] sm:$0xff] %v194
        %229 = vst [vmem:[%s210 + $0x22] sm:$0xff] %v195
        %230 = vst [vmem:[%s210 + $0x32] sm:$0xff] %v196
        %231 = vst [vmem:[%s210 + $0x42] sm:$0xff] %v197
        %232 = vst [vmem:[%s210 + $0x52] sm:$0xff] %v198
        %233 = vst [vmem:[%s210 + $0x62] sm:$0xff] %v199
        %234 = vst [vmem:[%s210 + $0x72] sm:$0xff] %v200
        %v235 = vld [vmem:[#allocation2] sm:$0xff]
        %v236 = vld [vmem:[#allocation2 + $0x10] sm:$0xff]
        %v237 = vld [vmem:[#allocation2 + $0x20] sm:$0xff]
        %v238 = vld [vmem:[#allocation2 + $0x30] sm:$0xff]
        %v239 = vld [vmem:[#allocation2 + $0x40] sm:$0xff]
        %v240 = vld [vmem:[#allocation2 + $0x50] sm:$0xff]
        %v241 = vld [vmem:[#allocation2 + $0x60] sm:$0xff]
        %v242 = vld [vmem:[#allocation2 + $0x70] sm:$0xff]
        %v243 = vmul.f32 %v193, %v235
        %v244 = vmul.f32 %v194, %v236
        %v245 = vmul.f32 %v195, %v237
        %v246 = vmul.f32 %v196, %v238
        %v247 = vmul.f32 %v197, %v239
        %v248 = vmul.f32 %v198, %v240
        %v249 = vmul.f32 %v199, %v241
        %v250 = vmul.f32 %v200, %v242
        %251 = vst [vmem:[%s136] sm:$0xff] %v243
        %252 = vst [vmem:[%s136 + $0x8] sm:$0xff] %v244
        %253 = vst [vmem:[%s136 + $0x10] sm:$0xff] %v245
        %254 = vst [vmem:[%s136 + $0x18] sm:$0xff] %v246
        %255 = vst [vmem:[%s136 + $0x20] sm:$0xff] %v247
        %256 = vst [vmem:[%s136 + $0x28] sm:$0xff] %v248
        %257 = vst [vmem:[%s136 + $0x30] sm:$0xff] %v249
        %258 = vst [vmem:[%s136 + $0x38] sm:$0xff] %v250
        %v259 = vld [vmem:[#allocation2 + $0x1] sm:$0xff]
        %v260 = vld [vmem:[#allocation2 + $0x11] sm:$0xff]
        %v261 = vld [vmem:[#allocation2 + $0x21] sm:$0xff]
        %v262 = vld [vmem:[#allocation2 + $0x31] sm:$0xff]
        %v263 = vld [vmem:[#allocation2 + $0x41] sm:$0xff]
        %v264 = vld [vmem:[#allocation2 + $0x51] sm:$0xff]
        %v265 = vld [vmem:[#allocation2 + $0x61] sm:$0xff]
        %v266 = vld [vmem:[#allocation2 + $0x71] sm:$0xff]
        %v267 = vmul.f32 %v193, %v259
        %v268 = vmul.f32 %v194, %v260
        %v269 = vmul.f32 %v195, %v261
        %v270 = vmul.f32 %v196, %v262
        %v271 = vmul.f32 %v197, %v263
        %v272 = vmul.f32 %v198, %v264
        %v273 = vmul.f32 %v199, %v265
        %v274 = vmul.f32 %v200, %v266
        %s275 = scalar_lea.vmem %s136, 64
        %276 = vst [vmem:[%s275] sm:$0xff] %v267
        %277 = vst [vmem:[%s275 + $0x8] sm:$0xff] %v268
        %278 = vst [vmem:[%s275 + $0x10] sm:$0xff] %v269
        %279 = vst [vmem:[%s275 + $0x18] sm:$0xff] %v270
        %280 = vst [vmem:[%s275 + $0x20] sm:$0xff] %v271
        %281 = vst [vmem:[%s275 + $0x28] sm:$0xff] %v272
        %282 = vst [vmem:[%s275 + $0x30] sm:$0xff] %v273
        %283 = vst [vmem:[%s275 + $0x38] sm:$0xff] %v274
        %v284 = vld [vmem:[#allocation2 + $0x2] sm:$0xff]
        %v285 = vld [vmem:[#allocation2 + $0x12] sm:$0xff]
        %v286 = vld [vmem:[#allocation2 + $0x22] sm:$0xff]
        %v287 = vld [vmem:[#allocation2 + $0x32] sm:$0xff]
        %v288 = vld [vmem:[#allocation2 + $0x42] sm:$0xff]
        %v289 = vld [vmem:[#allocation2 + $0x52] sm:$0xff]
        %v290 = vld [vmem:[#allocation2 + $0x62] sm:$0xff]
        %v291 = vld [vmem:[#allocation2 + $0x72] sm:$0xff]
        %v292 = vmul.f32 %v193, %v284
        %v293 = vmul.f32 %v194, %v285
        %v294 = vmul.f32 %v195, %v286
        %v295 = vmul.f32 %v196, %v287
        %v296 = vmul.f32 %v197, %v288
        %v297 = vmul.f32 %v198, %v289
        %v298 = vmul.f32 %v199, %v290
        %v299 = vmul.f32 %v200, %v291
        %s300 = scalar_lea.vmem %s136, 128
        %301 = vst [vmem:[%s300] sm:$0xff] %v292
        %302 = vst [vmem:[%s300 + $0x8] sm:$0xff] %v293
        %303 = vst [vmem:[%s300 + $0x10] sm:$0xff] %v294
        %304 = vst [vmem:[%s300 + $0x18] sm:$0xff] %v295
        %305 = vst [vmem:[%s300 + $0x20] sm:$0xff] %v296
        %306 = vst [vmem:[%s300 + $0x28] sm:$0xff] %v297
        %307 = vst [vmem:[%s300 + $0x30] sm:$0xff] %v298
        %308 = vst [vmem:[%s300 + $0x38] sm:$0xff] %v299
        %v309 = vld [vmem:[#allocation2 + $0x3] sm:$0xff]
        %v310 = vld [vmem:[#allocation2 + $0x13] sm:$0xff]
        %v311 = vld [vmem:[#allocation2 + $0x23] sm:$0xff]
        %v312 = vld [vmem:[#allocation2 + $0x33] sm:$0xff]
        %v313 = vld [vmem:[#allocation2 + $0x43] sm:$0xff]
        %v314 = vld [vmem:[#allocation2 + $0x53] sm:$0xff]
        %v315 = vld [vmem:[#allocation2 + $0x63] sm:$0xff]
        %v316 = vld [vmem:[#allocation2 + $0x73] sm:$0xff]
        %v317 = vmul.f32 %v193, %v309
        %v318 = vmul.f32 %v194, %v310
        %v319 = vmul.f32 %v195, %v311
        %v320 = vmul.f32 %v196, %v312
        %v321 = vmul.f32 %v197, %v313
        %v322 = vmul.f32 %v198, %v314
        %v323 = vmul.f32 %v199, %v315
        %v324 = vmul.f32 %v200, %v316
        %s325 = scalar_lea.vmem %s136, 192
        %326 = vst [vmem:[%s325] sm:$0xff] %v317
        %327 = vst [vmem:[%s325 + $0x8] sm:$0xff] %v318
        %328 = vst [vmem:[%s325 + $0x10] sm:$0xff] %v319
        %329 = vst [vmem:[%s325 + $0x18] sm:$0xff] %v320
        %330 = vst [vmem:[%s325 + $0x20] sm:$0xff] %v321
        %331 = vst [vmem:[%s325 + $0x28] sm:$0xff] %v322
        %332 = vst [vmem:[%s325 + $0x30] sm:$0xff] %v323
        %333 = vst [vmem:[%s325 + $0x38] sm:$0xff] %v324
        %v334 = vld [vmem:[#allocation2 + $0x4] sm:$0xff]
        %v335 = vld [vmem:[#allocation2 + $0x14] sm:$0xff]
        %v336 = vld [vmem:[#allocation2 + $0x24] sm:$0xff]
        %v337 = vld [vmem:[#allocation2 + $0x34] sm:$0xff]
        %v338 = vld [vmem:[#allocation2 + $0x44] sm:$0xff]
        %v339 = vld [vmem:[#allocation2 + $0x54] sm:$0xff]
        %v340 = vld [vmem:[#allocation2 + $0x64] sm:$0xff]
        %v341 = vld [vmem:[#allocation2 + $0x74] sm:$0xff]
        %v342 = vmul.f32 %v193, %v334
        %v343 = vmul.f32 %v194, %v335
        %v344 = vmul.f32 %v195, %v336
        %v345 = vmul.f32 %v196, %v337
        %v346 = vmul.f32 %v197, %v338
        %v347 = vmul.f32 %v198, %v339
        %v348 = vmul.f32 %v199, %v340
        %v349 = vmul.f32 %v200, %v341
        %s350 = scalar_lea.vmem %s136, 256
        %351 = vst [vmem:[%s350] sm:$0xff] %v342
        %352 = vst [vmem:[%s350 + $0x8] sm:$0xff] %v343
        %353 = vst [vmem:[%s350 + $0x10] sm:$0xff] %v344
        %354 = vst [vmem:[%s350 + $0x18] sm:$0xff] %v345
        %355 = vst [vmem:[%s350 + $0x20] sm:$0xff] %v346
        %356 = vst [vmem:[%s350 + $0x28] sm:$0xff] %v347
        %357 = vst [vmem:[%s350 + $0x30] sm:$0xff] %v348
        %358 = vst [vmem:[%s350 + $0x38] sm:$0xff] %v349
        %s359 = scalar_lea.vmem [#allocation2], 16
        %v360 = vld [vmem:[%s359] sm:$0xff]
        %v361 = vld [vmem:[%s359 + $0x10] sm:$0xff]
        %v362 = vld [vmem:[%s359 + $0x20] sm:$0xff]
        %v363 = vld [vmem:[%s359 + $0x30] sm:$0xff]
        %v364 = vld [vmem:[%s359 + $0x40] sm:$0xff]
        %v365 = vld [vmem:[%s359 + $0x50] sm:$0xff]
        %v366 = vld [vmem:[%s359 + $0x60] sm:$0xff]
        %v367 = vld [vmem:[%s359 + $0x70] sm:$0xff]
        %v368 = vmul.f32 %v193, %v360
        %v369 = vmul.f32 %v194, %v361
        %v370 = vmul.f32 %v195, %v362
        %v371 = vmul.f32 %v196, %v363
        %v372 = vmul.f32 %v197, %v364
        %v373 = vmul.f32 %v198, %v365
        %v374 = vmul.f32 %v199, %v366
        %v375 = vmul.f32 %v200, %v367
        %s376 = scalar_lea.vmem %s136, 320
        %377 = vst [vmem:[%s376] sm:$0xff] %v368
        %378 = vst [vmem:[%s376 + $0x8] sm:$0xff] %v369
        %379 = vst [vmem:[%s376 + $0x10] sm:$0xff] %v370
        %380 = vst [vmem:[%s376 + $0x18] sm:$0xff] %v371
        %381 = vst [vmem:[%s376 + $0x20] sm:$0xff] %v372
        %382 = vst [vmem:[%s376 + $0x28] sm:$0xff] %v373
        %383 = vst [vmem:[%s376 + $0x30] sm:$0xff] %v374
        %384 = vst [vmem:[%s376 + $0x38] sm:$0xff] %v375
        %v385 = vld [vmem:[%s359 + $0x1] sm:$0xff]
        %v386 = vld [vmem:[%s359 + $0x11] sm:$0xff]
        %v387 = vld [vmem:[%s359 + $0x21] sm:$0xff]
        %v388 = vld [vmem:[%s359 + $0x31] sm:$0xff]
        %v389 = vld [vmem:[%s359 + $0x41] sm:$0xff]
        %v390 = vld [vmem:[%s359 + $0x51] sm:$0xff]
        %v391 = vld [vmem:[%s359 + $0x61] sm:$0xff]
        %v392 = vld [vmem:[%s359 + $0x71] sm:$0xff]
        %v393 = vmul.f32 %v193, %v385
        %v394 = vmul.f32 %v194, %v386
        %v395 = vmul.f32 %v195, %v387
        %v396 = vmul.f32 %v196, %v388
        %v397 = vmul.f32 %v197, %v389
        %v398 = vmul.f32 %v198, %v390
        %v399 = vmul.f32 %v199, %v391
        %v400 = vmul.f32 %v200, %v392
        %s401 = scalar_lea.vmem %s136, 384
        %402 = vst [vmem:[%s401] sm:$0xff] %v393
        %403 = vst [vmem:[%s401 + $0x8] sm:$0xff] %v394
        %404 = vst [vmem:[%s401 + $0x10] sm:$0xff] %v395
        %405 = vst [vmem:[%s401 + $0x18] sm:$0xff] %v396
        %406 = vst [vmem:[%s401 + $0x20] sm:$0xff] %v397
        %407 = vst [vmem:[%s401 + $0x28] sm:$0xff] %v398
        %408 = vst [vmem:[%s401 + $0x30] sm:$0xff] %v399
        %409 = vst [vmem:[%s401 + $0x38] sm:$0xff] %v400
        %v410 = vld [vmem:[%s359 + $0x2] sm:$0xff]
        %v411 = vld [vmem:[%s359 + $0x12] sm:$0xff]
        %v412 = vld [vmem:[%s359 + $0x22] sm:$0xff]
        %v413 = vld [vmem:[%s359 + $0x32] sm:$0xff]
        %v414 = vld [vmem:[%s359 + $0x42] sm:$0xff]
        %v415 = vld [vmem:[%s359 + $0x52] sm:$0xff]
        %v416 = vld [vmem:[%s359 + $0x62] sm:$0xff]
        %v417 = vld [vmem:[%s359 + $0x72] sm:$0xff]
        %v418 = vmul.f32 %v193, %v410
        %v419 = vmul.f32 %v194, %v411
        %v420 = vmul.f32 %v195, %v412
        %v421 = vmul.f32 %v196, %v413
        %v422 = vmul.f32 %v197, %v414
        %v423 = vmul.f32 %v198, %v415
        %v424 = vmul.f32 %v199, %v416
        %v425 = vmul.f32 %v200, %v417
        %s426 = scalar_lea.vmem %s136, 448
        %427 = vst [vmem:[%s426] sm:$0xff] %v418
        %428 = vst [vmem:[%s426 + $0x8] sm:$0xff] %v419
        %429 = vst [vmem:[%s426 + $0x10] sm:$0xff] %v420
        %430 = vst [vmem:[%s426 + $0x18] sm:$0xff] %v421
        %431 = vst [vmem:[%s426 + $0x20] sm:$0xff] %v422
        %432 = vst [vmem:[%s426 + $0x28] sm:$0xff] %v423
        %433 = vst [vmem:[%s426 + $0x30] sm:$0xff] %v424
        %434 = vst [vmem:[%s426 + $0x38] sm:$0xff] %v425
        %v435 = vld [vmem:[%s359 + $0x3] sm:$0xff]
        %v436 = vld [vmem:[%s359 + $0x13] sm:$0xff]
        %v437 = vld [vmem:[%s359 + $0x23] sm:$0xff]
        %v438 = vld [vmem:[%s359 + $0x33] sm:$0xff]
        %v439 = vld [vmem:[%s359 + $0x43] sm:$0xff]
        %v440 = vld [vmem:[%s359 + $0x53] sm:$0xff]
        %v441 = vld [vmem:[%s359 + $0x63] sm:$0xff]
        %v442 = vld [vmem:[%s359 + $0x73] sm:$0xff]
        %v443 = vmul.f32 %v193, %v435
        %v444 = vmul.f32 %v194, %v436
        %v445 = vmul.f32 %v195, %v437
        %v446 = vmul.f32 %v196, %v438
        %v447 = vmul.f32 %v197, %v439
        %v448 = vmul.f32 %v198, %v440
        %v449 = vmul.f32 %v199, %v441
        %v450 = vmul.f32 %v200, %v442
        %s451 = scalar_lea.vmem %s136, 512
        %452 = vst [vmem:[%s451] sm:$0xff] %v443
        %453 = vst [vmem:[%s451 + $0x8] sm:$0xff] %v444
        %454 = vst [vmem:[%s451 + $0x10] sm:$0xff] %v445
        %455 = vst [vmem:[%s451 + $0x18] sm:$0xff] %v446
        %456 = vst [vmem:[%s451 + $0x20] sm:$0xff] %v447
        %457 = vst [vmem:[%s451 + $0x28] sm:$0xff] %v448
        %458 = vst [vmem:[%s451 + $0x30] sm:$0xff] %v449
        %459 = vst [vmem:[%s451 + $0x38] sm:$0xff] %v450
        %v460 = vld [vmem:[%s359 + $0x4] sm:$0xff]
        %v461 = vld [vmem:[%s359 + $0x14] sm:$0xff]
        %v462 = vld [vmem:[%s359 + $0x24] sm:$0xff]
        %v463 = vld [vmem:[%s359 + $0x34] sm:$0xff]
        %v464 = vld [vmem:[%s359 + $0x44] sm:$0xff]
        %v465 = vld [vmem:[%s359 + $0x54] sm:$0xff]
        %v466 = vld [vmem:[%s359 + $0x64] sm:$0xff]
        %v467 = vld [vmem:[%s359 + $0x74] sm:$0xff]
        %v468 = vmul.f32 %v193, %v460
        %v469 = vmul.f32 %v194, %v461
        %v470 = vmul.f32 %v195, %v462
        %v471 = vmul.f32 %v196, %v463
        %v472 = vmul.f32 %v197, %v464
        %v473 = vmul.f32 %v198, %v465
        %v474 = vmul.f32 %v199, %v466
        %v475 = vmul.f32 %v200, %v467
        %s476 = scalar_lea.vmem %s136, 576
        %477 = vst [vmem:[%s476] sm:$0xff] %v468
        %478 = vst [vmem:[%s476 + $0x8] sm:$0xff] %v469
        %479 = vst [vmem:[%s476 + $0x10] sm:$0xff] %v470
        %480 = vst [vmem:[%s476 + $0x18] sm:$0xff] %v471
        %481 = vst [vmem:[%s476 + $0x20] sm:$0xff] %v472
        %482 = vst [vmem:[%s476 + $0x28] sm:$0xff] %v473
        %483 = vst [vmem:[%s476 + $0x30] sm:$0xff] %v474
        %484 = vst [vmem:[%s476 + $0x38] sm:$0xff] %v475
        %v485 = vld [vmem:[%s210] sm:$0xff]
        %v486 = vld [vmem:[%s210 + $0x10] sm:$0xff]
        %v487 = vld [vmem:[%s210 + $0x20] sm:$0xff]
        %v488 = vld [vmem:[%s210 + $0x30] sm:$0xff]
        %v489 = vld [vmem:[%s210 + $0x40] sm:$0xff]
        %v490 = vld [vmem:[%s210 + $0x50] sm:$0xff]
        %v491 = vld [vmem:[%s210 + $0x60] sm:$0xff]
        %v492 = vld [vmem:[%s210 + $0x70] sm:$0xff]
        %v493 = vmul.f32 %v193, %v485
        %v494 = vmul.f32 %v194, %v486
        %v495 = vmul.f32 %v195, %v487
        %v496 = vmul.f32 %v196, %v488
        %v497 = vmul.f32 %v197, %v489
        %v498 = vmul.f32 %v198, %v490
        %v499 = vmul.f32 %v199, %v491
        %v500 = vmul.f32 %v200, %v492
        %s501 = scalar_lea.vmem %s136, 640
        %502 = vst [vmem:[%s501] sm:$0xff] %v493
        %503 = vst [vmem:[%s501 + $0x8] sm:$0xff] %v494
        %504 = vst [vmem:[%s501 + $0x10] sm:$0xff] %v495
        %505 = vst [vmem:[%s501 + $0x18] sm:$0xff] %v496
        %506 = vst [vmem:[%s501 + $0x20] sm:$0xff] %v497
        %507 = vst [vmem:[%s501 + $0x28] sm:$0xff] %v498
        %508 = vst [vmem:[%s501 + $0x30] sm:$0xff] %v499
        %509 = vst [vmem:[%s501 + $0x38] sm:$0xff] %v500
        %v510 = vld [vmem:[%s210 + $0x1] sm:$0xff]
        %v511 = vld [vmem:[%s210 + $0x11] sm:$0xff]
        %v512 = vld [vmem:[%s210 + $0x21] sm:$0xff]
        %v513 = vld [vmem:[%s210 + $0x31] sm:$0xff]
        %v514 = vld [vmem:[%s210 + $0x41] sm:$0xff]
        %v515 = vld [vmem:[%s210 + $0x51] sm:$0xff]
        %v516 = vld [vmem:[%s210 + $0x61] sm:$0xff]
        %v517 = vld [vmem:[%s210 + $0x71] sm:$0xff]
        %v518 = vmul.f32 %v193, %v510
        %v519 = vmul.f32 %v194, %v511
        %v520 = vmul.f32 %v195, %v512
        %v521 = vmul.f32 %v196, %v513
        %v522 = vmul.f32 %v197, %v514
        %v523 = vmul.f32 %v198, %v515
        %v524 = vmul.f32 %v199, %v516
        %v525 = vmul.f32 %v200, %v517
        %s526 = scalar_lea.vmem %s136, 704
        %527 = vst [vmem:[%s526] sm:$0xff] %v518
        %528 = vst [vmem:[%s526 + $0x8] sm:$0xff] %v519
        %529 = vst [vmem:[%s526 + $0x10] sm:$0xff] %v520
        %530 = vst [vmem:[%s526 + $0x18] sm:$0xff] %v521
        %531 = vst [vmem:[%s526 + $0x20] sm:$0xff] %v522
        %532 = vst [vmem:[%s526 + $0x28] sm:$0xff] %v523
        %533 = vst [vmem:[%s526 + $0x30] sm:$0xff] %v524
        %534 = vst [vmem:[%s526 + $0x38] sm:$0xff] %v525
        %v535 = vld [vmem:[%s210 + $0x2] sm:$0xff]
        %v536 = vld [vmem:[%s210 + $0x12] sm:$0xff]
        %v537 = vld [vmem:[%s210 + $0x22] sm:$0xff]
        %v538 = vld [vmem:[%s210 + $0x32] sm:$0xff]
        %v539 = vld [vmem:[%s210 + $0x42] sm:$0xff]
        %v540 = vld [vmem:[%s210 + $0x52] sm:$0xff]
        %v541 = vld [vmem:[%s210 + $0x62] sm:$0xff]
        %v542 = vld [vmem:[%s210 + $0x72] sm:$0xff]
        %v543 = vmul.f32 %v193, %v535
        %v544 = vmul.f32 %v194, %v536
        %v545 = vmul.f32 %v195, %v537
        %v546 = vmul.f32 %v196, %v538
        %v547 = vmul.f32 %v197, %v539
        %v548 = vmul.f32 %v198, %v540
        %v549 = vmul.f32 %v199, %v541
        %v550 = vmul.f32 %v200, %v542
        %s551 = scalar_lea.vmem %s136, 768
        %552 = vst [vmem:[%s551] sm:$0xff] %v543
        %553 = vst [vmem:[%s551 + $0x8] sm:$0xff] %v544
        %554 = vst [vmem:[%s551 + $0x10] sm:$0xff] %v545
        %555 = vst [vmem:[%s551 + $0x18] sm:$0xff] %v546
        %556 = vst [vmem:[%s551 + $0x20] sm:$0xff] %v547
        %557 = vst [vmem:[%s551 + $0x28] sm:$0xff] %v548
        %558 = vst [vmem:[%s551 + $0x30] sm:$0xff] %v549
        %559 = vst [vmem:[%s551 + $0x38] sm:$0xff] %v550
        %v560 = vld [vmem:[%s210 + $0x3] sm:$0xff]
        %v561 = vld [vmem:[%s210 + $0x13] sm:$0xff]
        %v562 = vld [vmem:[%s210 + $0x23] sm:$0xff]
        %v563 = vld [vmem:[%s210 + $0x33] sm:$0xff]
        %v564 = vld [vmem:[%s210 + $0x43] sm:$0xff]
        %v565 = vld [vmem:[%s210 + $0x53] sm:$0xff]
        %v566 = vld [vmem:[%s210 + $0x63] sm:$0xff]
        %v567 = vld [vmem:[%s210 + $0x73] sm:$0xff]
        %v568 = vmul.f32 %v193, %v560
        %v569 = vmul.f32 %v194, %v561
        %v570 = vmul.f32 %v195, %v562
        %v571 = vmul.f32 %v196, %v563
        %v572 = vmul.f32 %v197, %v564
        %v573 = vmul.f32 %v198, %v565
        %v574 = vmul.f32 %v199, %v566
        %v575 = vmul.f32 %v200, %v567
        %s576 = scalar_lea.vmem %s136, 832
        %577 = vst [vmem:[%s576] sm:$0xff] %v568
        %578 = vst [vmem:[%s576 + $0x8] sm:$0xff] %v569
        %579 = vst [vmem:[%s576 + $0x10] sm:$0xff] %v570
        %580 = vst [vmem:[%s576 + $0x18] sm:$0xff] %v571
        %581 = vst [vmem:[%s576 + $0x20] sm:$0xff] %v572
        %582 = vst [vmem:[%s576 + $0x28] sm:$0xff] %v573
        %583 = vst [vmem:[%s576 + $0x30] sm:$0xff] %v574
        %584 = vst [vmem:[%s576 + $0x38] sm:$0xff] %v575
        %v585 = vld [vmem:[%s210 + $0x4] sm:$0xff]
        %v586 = vld [vmem:[%s210 + $0x14] sm:$0xff]
        %v587 = vld [vmem:[%s210 + $0x24] sm:$0xff]
        %v588 = vld [vmem:[%s210 + $0x34] sm:$0xff]
        %v589 = vld [vmem:[%s210 + $0x44] sm:$0xff]
        %v590 = vld [vmem:[%s210 + $0x54] sm:$0xff]
        %v591 = vld [vmem:[%s210 + $0x64] sm:$0xff]
        %v592 = vld [vmem:[%s210 + $0x74] sm:$0xff]
        %v593 = vmul.f32 %v193, %v585
        %v594 = vmul.f32 %v194, %v586
        %v595 = vmul.f32 %v195, %v587
        %v596 = vmul.f32 %v196, %v588
        %v597 = vmul.f32 %v197, %v589
        %v598 = vmul.f32 %v198, %v590
        %v599 = vmul.f32 %v199, %v591
        %v600 = vmul.f32 %v200, %v592
        %s601 = scalar_lea.vmem %s136, 896
        %602 = vst [vmem:[%s601] sm:$0xff] %v593
        %603 = vst [vmem:[%s601 + $0x8] sm:$0xff] %v594
        %604 = vst [vmem:[%s601 + $0x10] sm:$0xff] %v595
        %605 = vst [vmem:[%s601 + $0x18] sm:$0xff] %v596
        %606 = vst [vmem:[%s601 + $0x20] sm:$0xff] %v597
        %607 = vst [vmem:[%s601 + $0x28] sm:$0xff] %v598
        %608 = vst [vmem:[%s601 + $0x30] sm:$0xff] %v599
        %609 = vst [vmem:[%s601 + $0x38] sm:$0xff] %v600
        %s610 = scalar_lea.vmem [#allocation2], 48
        %v611 = vld [vmem:[%s610] sm:$0xff]
        %v612 = vld [vmem:[%s610 + $0x10] sm:$0xff]
        %v613 = vld [vmem:[%s610 + $0x20] sm:$0xff]
        %v614 = vld [vmem:[%s610 + $0x30] sm:$0xff]
        %v615 = vld [vmem:[%s610 + $0x40] sm:$0xff]
        %v616 = vld [vmem:[%s610 + $0x50] sm:$0xff]
        %v617 = vld [vmem:[%s610 + $0x60] sm:$0xff]
        %v618 = vld [vmem:[%s610 + $0x70] sm:$0xff]
        %v619 = vmul.f32 %v193, %v611
        %v620 = vmul.f32 %v194, %v612
        %v621 = vmul.f32 %v195, %v613
        %v622 = vmul.f32 %v196, %v614
        %v623 = vmul.f32 %v197, %v615
        %v624 = vmul.f32 %v198, %v616
        %v625 = vmul.f32 %v199, %v617
        %v626 = vmul.f32 %v200, %v618
        %s627 = scalar_lea.vmem %s136, 960
        %628 = vst [vmem:[%s627] sm:$0xff] %v619
        %629 = vst [vmem:[%s627 + $0x8] sm:$0xff] %v620
        %630 = vst [vmem:[%s627 + $0x10] sm:$0xff] %v621
        %631 = vst [vmem:[%s627 + $0x18] sm:$0xff] %v622
        %632 = vst [vmem:[%s627 + $0x20] sm:$0xff] %v623
        %633 = vst [vmem:[%s627 + $0x28] sm:$0xff] %v624
        %634 = vst [vmem:[%s627 + $0x30] sm:$0xff] %v625
        %635 = vst [vmem:[%s627 + $0x38] sm:$0xff] %v626
        %v636 = vld [vmem:[%s610 + $0x1] sm:$0xff]
        %v637 = vld [vmem:[%s610 + $0x11] sm:$0xff]
        %v638 = vld [vmem:[%s610 + $0x21] sm:$0xff]
        %v639 = vld [vmem:[%s610 + $0x31] sm:$0xff]
        %v640 = vld [vmem:[%s610 + $0x41] sm:$0xff]
        %v641 = vld [vmem:[%s610 + $0x51] sm:$0xff]
        %v642 = vld [vmem:[%s610 + $0x61] sm:$0xff]
        %v643 = vld [vmem:[%s610 + $0x71] sm:$0xff]
        %v644 = vmul.f32 %v193, %v636
        %v645 = vmul.f32 %v194, %v637
        %v646 = vmul.f32 %v195, %v638
        %v647 = vmul.f32 %v196, %v639
        %v648 = vmul.f32 %v197, %v640
        %v649 = vmul.f32 %v198, %v641
        %v650 = vmul.f32 %v199, %v642
        %v651 = vmul.f32 %v200, %v643
        %s652 = scalar_lea.vmem %s136, 1024
        %653 = vst [vmem:[%s652] sm:$0xff] %v644
        %654 = vst [vmem:[%s652 + $0x8] sm:$0xff] %v645
        %655 = vst [vmem:[%s652 + $0x10] sm:$0xff] %v646
        %656 = vst [vmem:[%s652 + $0x18] sm:$0xff] %v647
        %657 = vst [vmem:[%s652 + $0x20] sm:$0xff] %v648
        %658 = vst [vmem:[%s652 + $0x28] sm:$0xff] %v649
        %659 = vst [vmem:[%s652 + $0x30] sm:$0xff] %v650
        %660 = vst [vmem:[%s652 + $0x38] sm:$0xff] %v651
        %v661 = vld [vmem:[%s610 + $0x2] sm:$0xff]
        %v662 = vld [vmem:[%s610 + $0x12] sm:$0xff]
        %v663 = vld [vmem:[%s610 + $0x22] sm:$0xff]
        %v664 = vld [vmem:[%s610 + $0x32] sm:$0xff]
        %v665 = vld [vmem:[%s610 + $0x42] sm:$0xff]
        %v666 = vld [vmem:[%s610 + $0x52] sm:$0xff]
        %v667 = vld [vmem:[%s610 + $0x62] sm:$0xff]
        %v668 = vld [vmem:[%s610 + $0x72] sm:$0xff]
        %v669 = vmul.f32 %v193, %v661
        %v670 = vmul.f32 %v194, %v662
        %v671 = vmul.f32 %v195, %v663
        %v672 = vmul.f32 %v196, %v664
        %v673 = vmul.f32 %v197, %v665
        %v674 = vmul.f32 %v198, %v666
        %v675 = vmul.f32 %v199, %v667
        %v676 = vmul.f32 %v200, %v668
        %s677 = scalar_lea.vmem %s136, 1088
        %678 = vst [vmem:[%s677] sm:$0xff] %v669
        %679 = vst [vmem:[%s677 + $0x8] sm:$0xff] %v670
        %680 = vst [vmem:[%s677 + $0x10] sm:$0xff] %v671
        %681 = vst [vmem:[%s677 + $0x18] sm:$0xff] %v672
        %682 = vst [vmem:[%s677 + $0x20] sm:$0xff] %v673
        %683 = vst [vmem:[%s677 + $0x28] sm:$0xff] %v674
        %684 = vst [vmem:[%s677 + $0x30] sm:$0xff] %v675
        %685 = vst [vmem:[%s677 + $0x38] sm:$0xff] %v676
        %v686 = vld [vmem:[%s610 + $0x3] sm:$0xff]
        %v687 = vld [vmem:[%s610 + $0x13] sm:$0xff]
        %v688 = vld [vmem:[%s610 + $0x23] sm:$0xff]
        %v689 = vld [vmem:[%s610 + $0x33] sm:$0xff]
        %v690 = vld [vmem:[%s610 + $0x43] sm:$0xff]
        %v691 = vld [vmem:[%s610 + $0x53] sm:$0xff]
        %v692 = vld [vmem:[%s610 + $0x63] sm:$0xff]
        %v693 = vld [vmem:[%s610 + $0x73] sm:$0xff]
        %v694 = vmul.f32 %v193, %v686
        %v695 = vmul.f32 %v194, %v687
        %v696 = vmul.f32 %v195, %v688
        %v697 = vmul.f32 %v196, %v689
        %v698 = vmul.f32 %v197, %v690
        %v699 = vmul.f32 %v198, %v691
        %v700 = vmul.f32 %v199, %v692
        %v701 = vmul.f32 %v200, %v693
        %s702 = scalar_lea.vmem %s136, 1152
        %703 = vst [vmem:[%s702] sm:$0xff] %v694
        %704 = vst [vmem:[%s702 + $0x8] sm:$0xff] %v695
        %705 = vst [vmem:[%s702 + $0x10] sm:$0xff] %v696
        %706 = vst [vmem:[%s702 + $0x18] sm:$0xff] %v697
        %707 = vst [vmem:[%s702 + $0x20] sm:$0xff] %v698
        %708 = vst [vmem:[%s702 + $0x28] sm:$0xff] %v699
        %709 = vst [vmem:[%s702 + $0x30] sm:$0xff] %v700
        %710 = vst [vmem:[%s702 + $0x38] sm:$0xff] %v701
        %v711 = vld [vmem:[%s610 + $0x4] sm:$0xff]
        %v712 = vld [vmem:[%s610 + $0x14] sm:$0xff]
        %v713 = vld [vmem:[%s610 + $0x24] sm:$0xff]
        %v714 = vld [vmem:[%s610 + $0x34] sm:$0xff]
        %v715 = vld [vmem:[%s610 + $0x44] sm:$0xff]
        %v716 = vld [vmem:[%s610 + $0x54] sm:$0xff]
        %v717 = vld [vmem:[%s610 + $0x64] sm:$0xff]
        %v718 = vld [vmem:[%s610 + $0x74] sm:$0xff]
        %v719 = vmul.f32 %v193, %v711
        %v720 = vmul.f32 %v194, %v712
        %v721 = vmul.f32 %v195, %v713
        %v722 = vmul.f32 %v196, %v714
        %v723 = vmul.f32 %v197, %v715
        %v724 = vmul.f32 %v198, %v716
        %v725 = vmul.f32 %v199, %v717
        %v726 = vmul.f32 %v200, %v718
        %s727 = scalar_lea.vmem %s136, 1216
        %728 = vst [vmem:[%s727] sm:$0xff] %v719
        %729 = vst [vmem:[%s727 + $0x8] sm:$0xff] %v720
        %730 = vst [vmem:[%s727 + $0x10] sm:$0xff] %v721
        %731 = vst [vmem:[%s727 + $0x18] sm:$0xff] %v722
        %732 = vst [vmem:[%s727 + $0x20] sm:$0xff] %v723
        %733 = vst [vmem:[%s727 + $0x28] sm:$0xff] %v724
        %734 = vst [vmem:[%s727 + $0x30] sm:$0xff] %v725
        %735 = vst [vmem:[%s727 + $0x38] sm:$0xff] %v726
        %s736 = scalar_lea.vmem [#allocation2], 64
        %v737 = vld [vmem:[%s736] sm:$0xff]
        %v738 = vld [vmem:[%s736 + $0x10] sm:$0xff]
        %v739 = vld [vmem:[%s736 + $0x20] sm:$0xff]
        %v740 = vld [vmem:[%s736 + $0x30] sm:$0xff]
        %v741 = vld [vmem:[%s736 + $0x40] sm:$0xff]
        %v742 = vld [vmem:[%s736 + $0x50] sm:$0xff]
        %v743 = vld [vmem:[%s736 + $0x60] sm:$0xff]
        %v744 = vld [vmem:[%s736 + $0x70] sm:$0xff]
        %v745 = vmul.f32 %v193, %v737
        %v746 = vmul.f32 %v194, %v738
        %v747 = vmul.f32 %v195, %v739
        %v748 = vmul.f32 %v196, %v740
        %v749 = vmul.f32 %v197, %v741
        %v750 = vmul.f32 %v198, %v742
        %v751 = vmul.f32 %v199, %v743
        %v752 = vmul.f32 %v200, %v744
        %s753 = scalar_lea.vmem %s136, 1280
        %754 = vst [vmem:[%s753] sm:$0xff] %v745
        %755 = vst [vmem:[%s753 + $0x8] sm:$0xff] %v746
        %756 = vst [vmem:[%s753 + $0x10] sm:$0xff] %v747
        %757 = vst [vmem:[%s753 + $0x18] sm:$0xff] %v748
        %758 = vst [vmem:[%s753 + $0x20] sm:$0xff] %v749
        %759 = vst [vmem:[%s753 + $0x28] sm:$0xff] %v750
        %760 = vst [vmem:[%s753 + $0x30] sm:$0xff] %v751
        %761 = vst [vmem:[%s753 + $0x38] sm:$0xff] %v752
        %v762 = vld [vmem:[%s736 + $0x1] sm:$0xff]
        %v763 = vld [vmem:[%s736 + $0x11] sm:$0xff]
        %v764 = vld [vmem:[%s736 + $0x21] sm:$0xff]
        %v765 = vld [vmem:[%s736 + $0x31] sm:$0xff]
        %v766 = vld [vmem:[%s736 + $0x41] sm:$0xff]
        %v767 = vld [vmem:[%s736 + $0x51] sm:$0xff]
        %v768 = vld [vmem:[%s736 + $0x61] sm:$0xff]
        %v769 = vld [vmem:[%s736 + $0x71] sm:$0xff]
        %v770 = vmul.f32 %v193, %v762
        %v771 = vmul.f32 %v194, %v763
        %v772 = vmul.f32 %v195, %v764
        %v773 = vmul.f32 %v196, %v765
        %v774 = vmul.f32 %v197, %v766
        %v775 = vmul.f32 %v198, %v767
        %v776 = vmul.f32 %v199, %v768
        %v777 = vmul.f32 %v200, %v769
        %s778 = scalar_lea.vmem %s136, 1344
        %779 = vst [vmem:[%s778] sm:$0xff] %v770
        %780 = vst [vmem:[%s778 + $0x8] sm:$0xff] %v771
        %781 = vst [vmem:[%s778 + $0x10] sm:$0xff] %v772
        %782 = vst [vmem:[%s778 + $0x18] sm:$0xff] %v773
        %783 = vst [vmem:[%s778 + $0x20] sm:$0xff] %v774
        %784 = vst [vmem:[%s778 + $0x28] sm:$0xff] %v775
        %785 = vst [vmem:[%s778 + $0x30] sm:$0xff] %v776
        %786 = vst [vmem:[%s778 + $0x38] sm:$0xff] %v777
        %v787 = vld [vmem:[%s736 + $0x2] sm:$0xff]
        %v788 = vld [vmem:[%s736 + $0x12] sm:$0xff]
        %v789 = vld [vmem:[%s736 + $0x22] sm:$0xff]
        %v790 = vld [vmem:[%s736 + $0x32] sm:$0xff]
        %v791 = vld [vmem:[%s736 + $0x42] sm:$0xff]
        %v792 = vld [vmem:[%s736 + $0x52] sm:$0xff]
        %v793 = vld [vmem:[%s736 + $0x62] sm:$0xff]
        %v794 = vld [vmem:[%s736 + $0x72] sm:$0xff]
        %v795 = vmul.f32 %v193, %v787
        %v796 = vmul.f32 %v194, %v788
        %v797 = vmul.f32 %v195, %v789
        %v798 = vmul.f32 %v196, %v790
        %v799 = vmul.f32 %v197, %v791
        %v800 = vmul.f32 %v198, %v792
        %v801 = vmul.f32 %v199, %v793
        %v802 = vmul.f32 %v200, %v794
        %s803 = scalar_lea.vmem %s136, 1408
        %804 = vst [vmem:[%s803] sm:$0xff] %v795
        %805 = vst [vmem:[%s803 + $0x8] sm:$0xff] %v796
        %806 = vst [vmem:[%s803 + $0x10] sm:$0xff] %v797
        %807 = vst [vmem:[%s803 + $0x18] sm:$0xff] %v798
        %808 = vst [vmem:[%s803 + $0x20] sm:$0xff] %v799
        %809 = vst [vmem:[%s803 + $0x28] sm:$0xff] %v800
        %810 = vst [vmem:[%s803 + $0x30] sm:$0xff] %v801
        %811 = vst [vmem:[%s803 + $0x38] sm:$0xff] %v802
        %v812 = vld [vmem:[%s736 + $0x3] sm:$0xff]
        %v813 = vld [vmem:[%s736 + $0x13] sm:$0xff]
        %v814 = vld [vmem:[%s736 + $0x23] sm:$0xff]
        %v815 = vld [vmem:[%s736 + $0x33] sm:$0xff]
        %v816 = vld [vmem:[%s736 + $0x43] sm:$0xff]
        %v817 = vld [vmem:[%s736 + $0x53] sm:$0xff]
        %v818 = vld [vmem:[%s736 + $0x63] sm:$0xff]
        %v819 = vld [vmem:[%s736 + $0x73] sm:$0xff]
        %v820 = vmul.f32 %v193, %v812
        %v821 = vmul.f32 %v194, %v813
        %v822 = vmul.f32 %v195, %v814
        %v823 = vmul.f32 %v196, %v815
        %v824 = vmul.f32 %v197, %v816
        %v825 = vmul.f32 %v198, %v817
        %v826 = vmul.f32 %v199, %v818
        %v827 = vmul.f32 %v200, %v819
        %s828 = scalar_lea.vmem %s136, 1472
        %829 = vst [vmem:[%s828] sm:$0xff] %v820
        %830 = vst [vmem:[%s828 + $0x8] sm:$0xff] %v821
        %831 = vst [vmem:[%s828 + $0x10] sm:$0xff] %v822
        %832 = vst [vmem:[%s828 + $0x18] sm:$0xff] %v823
        %833 = vst [vmem:[%s828 + $0x20] sm:$0xff] %v824
        %834 = vst [vmem:[%s828 + $0x28] sm:$0xff] %v825
        %835 = vst [vmem:[%s828 + $0x30] sm:$0xff] %v826
        %836 = vst [vmem:[%s828 + $0x38] sm:$0xff] %v827
        %v837 = vld [vmem:[%s736 + $0x4] sm:$0xff]
        %v838 = vld [vmem:[%s736 + $0x14] sm:$0xff]
        %v839 = vld [vmem:[%s736 + $0x24] sm:$0xff]
        %v840 = vld [vmem:[%s736 + $0x34] sm:$0xff]
        %v841 = vld [vmem:[%s736 + $0x44] sm:$0xff]
        %v842 = vld [vmem:[%s736 + $0x54] sm:$0xff]
        %v843 = vld [vmem:[%s736 + $0x64] sm:$0xff]
        %v844 = vld [vmem:[%s736 + $0x74] sm:$0xff]
        %v845 = vmul.f32 %v193, %v837
        %v846 = vmul.f32 %v194, %v838
        %v847 = vmul.f32 %v195, %v839
        %v848 = vmul.f32 %v196, %v840
        %v849 = vmul.f32 %v197, %v841
        %v850 = vmul.f32 %v198, %v842
        %v851 = vmul.f32 %v199, %v843
        %v852 = vmul.f32 %v200, %v844
        %s853 = scalar_lea.vmem %s136, 1536
        %854 = vst [vmem:[%s853] sm:$0xff] %v845
        %855 = vst [vmem:[%s853 + $0x8] sm:$0xff] %v846
        %856 = vst [vmem:[%s853 + $0x10] sm:$0xff] %v847
        %857 = vst [vmem:[%s853 + $0x18] sm:$0xff] %v848
        %858 = vst [vmem:[%s853 + $0x20] sm:$0xff] %v849
        %859 = vst [vmem:[%s853 + $0x28] sm:$0xff] %v850
        %860 = vst [vmem:[%s853 + $0x30] sm:$0xff] %v851
        %861 = vst [vmem:[%s853 + $0x38] sm:$0xff] %v852
        %p862 = scmp.lt.s32.totalorder %s15, 1
        %s863 = scalar_select %p862, %s15, 1
        %s864 = smul.addr %s863, 200
        %s865 = smul.addr %s864, 8
        %s866 = scalar_lea.vmem %s1, %s865
        // Predicated region
        $region29: #{self_correlation.1} parent=23 // pred_check
          %p867 = pneg %p59
        $region30: #{self_correlation.1} parent=23 // pred_check_branch
          %869 = sbr.rel (%p867) target = $region32
        $region31: #{self_correlation.1} parent=23 // pred_region
          _
        $region32: #{self_correlation.1} parent=23 // pred_fallthru
          _
      $region24: #{self_correlation.1} parent=5 // pred_fallthru
        _
      %p870 = scmp.le.s32.totalorder 2, %s10
      // Predicated region
      $region33: #{self_correlation.1} parent=5 // pred_check
        %p871 = pneg %p870
      $region34: #{self_correlation.1} parent=5 // pred_check_branch
        %873 = sbr.rel (%p871) target = $region36
      $region35: #{self_correlation.1} parent=5 // pred_region
        %s874 = ssub.s32 %s10, 2
        // Predicated region
        $region37: #{self_correlation.1} parent=35 // pred_check
          %p875 = pneg %p65
        $region38: #{self_correlation.1} parent=35 // pred_check_branch
          %877 = sbr.rel (%p875) target = $region40
        $region39: #{self_correlation.1} parent=35 // pred_region
          %p878 = scmp.lt.s32.totalorder %s16, 1
          %s879 = scalar_select %p878, %s16, 1
          %s880 = smul.addr %s879, 200
          %s881 = smul.addr %s880, 8
          %s882 = scalar_lea.vmem %s1, %s881
        $region40: #{self_correlation.1} parent=35 // pred_fallthru
          _
      $region36: #{self_correlation.1} parent=5 // pred_fallthru
        _
    $region6: #{self_correlation.1} parent=1 // loop_footer
      %s14 = sadd.s32 1, %s10
    $region7: #{self_correlation.1} parent=1 // loop_footer_branch
      %9 = sbr.rel target = $region3
    $region8: #{self_correlation.1} parent=1 // loop_exit
      _
    %883 = vsyncpa [#allocation4], 1
    %s884 = scalar_lea.sflag [#allocation4], 1
    %885 = vsyncpa %s884, 1

</llo_original>
